<compile_context>
chip_gen: v7x
topology: tpu7x:2x2x1
jax: 0.10.0
libtpu: 0.0.40
codegen_flags: <defaults>
</compile_context>

<pallas_src>
import functools

import jax
import jax.numpy as jnp
from jax import lax
from jax.experimental import pallas as pl
from jax.experimental.pallas import tpu as pltpu


# ----------------------------------------------------------------------------
# plain-JAX helpers (parameter init + reference check)
# ----------------------------------------------------------------------------
def _extend_grid(grid, k):
    # grid: (rows, G+1) -> (rows, G+1+2k)
    h = (grid[:, -1:] - grid[:, :1]) / (grid.shape[1] - 1)
    for _ in range(k):
        grid = jnp.concatenate([grid[:, :1] - h, grid], axis=1)
        grid = jnp.concatenate([grid, grid[:, -1:] + h], axis=1)
    return grid


def _b_batch_ref(x, grid, k):
    # x: (rows, batch), grid: (rows, G+1) -> basis (rows, G+k, batch)
    g = _extend_grid(grid, k)
    xg = x[:, None, :]          # (rows, 1, batch)
    gg = g[:, :, None]          # (rows, G_ext, 1)
    B = ((xg >= gg[:, :-1]) & (xg < gg[:, 1:])).astype(x.dtype)
    for d in range(1, k + 1):
        B = ((xg - gg[:, : -(d + 1)]) / (gg[:, d:-1] - gg[:, : -(d + 1)]) * B[:, :-1]
             + (gg[:, d + 1:] - xg) / (gg[:, d + 1:] - gg[:, 1:-d]) * B[:, 1:])
    return B


# ----------------------------------------------------------------------------
# Pallas kernel
# ----------------------------------------------------------------------------
def kan_kernel(x_ref, gext_ref, rcp_ref, off_ref, coef_ref, prm_ref, *out_refs,
               k, n_basis0, out_dim, in_dim, in_pad, chunk, num_chunks,
               emit_intermediates):
    if emit_intermediates:
        spline_ref, act_ref, y_ref = out_refs
    else:
        (y_ref,) = out_refs

    # ---- chunk-invariant loads & column views (hoisted out of the lane loop) --
    g = gext_ref[...]                     # (in_pad, G_ext)
    rcp = rcp_ref[...]                    # (in_pad, n_t1)    1 / (g[b+d] - g[b])
    off = off_ref[...]                    # (in_pad, n_t1)   -g[b] / (g[b+d] - g[b])
    coef = coef_ref[...]                  # (out_dim*in_pad, n_coef)
    prm = prm_ref[...]                    # (out_dim*in_pad, 2)  [mask*sb, mask*sp]
    n_coef = coef.shape[1]

    g_cols = [g[:, b:b + 1] for b in range(n_basis0 + 1)]
    rcp_cols = [rcp[:, j:j + 1] for j in range(rcp.shape[1])]
    off_cols = [off[:, j:j + 1] for j in range(off.shape[1])]
    coef_cols = [[coef[o * in_pad:(o + 1) * in_pad, b:b + 1] for b in range(n_coef)]
                 for o in range(out_dim)]
    sb_cols = [prm[o * in_pad:(o + 1) * in_pad, 0:1] for o in range(out_dim)]
    sp_cols = [prm[o * in_pad:(o + 1) * in_pad, 1:2] for o in range(out_dim)]

    def chunk_body(c, carry):
        lo = pl.multiple_of(c * chunk, chunk)
        x = x_ref[:, pl.ds(lo, chunk)]                      # (in_pad, chunk)

        # degree-0 basis: share the ">= knot" comparisons between adjacent cells
        ge = [x >= g_cols[b] for b in range(n_basis0 + 1)]
        B = [jnp.logical_and(ge[b], jnp.logical_not(ge[b + 1])).astype(jnp.float32)
             for b in range(n_basis0)]

        # Cox-de Boor recursion, divide-free: t1 = x*rcp + off, t2[b] = 1 - t1[b+1]
        j = 0
        for d in range(1, k + 1):
            nb = n_basis0 - d
            t1 = [x * rcp_cols[j + b] + off_cols[j + b] for b in range(nb + 1)]
            B = [t1[b] * B[b] + (1.0 - t1[b + 1]) * B[b + 1] for b in range(nb)]
            j += nb + 1

        base = x * jax.nn.sigmoid(x)                        # SiLU, shared across out_dim

        y_rows = []
        for o in range(out_dim):
            spline_o = coef_cols[o][0] * B[0]
            for b in range(1, n_coef):
                spline_o = spline_o + coef_cols[o][b] * B[b]
            act_o = sb_cols[o] * base + sp_cols[o] * spline_o   # mask folded into sb/sp
            if emit_intermediates:
                spline_ref[o, :, pl.ds(lo, chunk)] = spline_o[:in_dim, :]
                act_ref[o, :, pl.ds(lo, chunk)] = act_o[:in_dim, :]
            # reduction over in_dim (padding rows are exactly zero), on VPU/XLU
            y_rows.append(jnp.sum(act_o, axis=0, keepdims=True))

        y_ref[:, pl.ds(lo, chunk)] = jnp.concatenate(y_rows, axis=0)
        return carry

    lax.fori_loop(0, num_chunks, chunk_body, 0, unroll=True)


# ----------------------------------------------------------------------------
# Module-equivalent wrapper
# ----------------------------------------------------------------------------
class KANLayerPallas:
    def __init__(self, in_dim=3, out_dim=2, num=5, k=3, noise_scale=0.1,
                 scale_base=1.0, scale_sp=1.0, grid_range=(-1.0, 1.0), key=None):
        self.in_dim, self.out_dim, self.num, self.k = in_dim, out_dim, num, k
        size = self.size = out_dim * in_dim

        grid1d = jnp.linspace(grid_range[0], grid_range[1], num + 1, dtype=jnp.float32)
        self.grid = jnp.broadcast_to(grid1d, (size, num + 1)).astype(jnp.float32)

        noises = (jax.random.uniform(key, (size, num + 1), dtype=jnp.float32) - 0.5) \
                 * noise_scale / num
        # coef = curve2coef(grid, noises, grid, k): per-row least squares (init glue,
        # stays in plain JAX; it is a one-time pinv, not part of the forward kernel)
        mat = jnp.transpose(_b_batch_ref(self.grid, self.grid, k), (0, 2, 1))
        self.coef = jnp.einsum('sij,sj->si', jnp.linalg.pinv(mat), noises)

        self.scale_base = jnp.full((size,), scale_base, jnp.float32)
        self.scale_sp = jnp.full((size,), scale_sp, jnp.float32)
        self.mask = jnp.ones((size,), jnp.float32)

    def __call__(self, x, return_intermediates=True):
        # x: (batch, channels=in_dim, H, W)  NCHW, like the torch module
        B, C, H, W = x.shape
        assert C == self.in_dim
        N = B * H * W
        in_dim, out_dim, k, num = self.in_dim, self.out_dim, self.k, self.num
        n_coef = self.coef.shape[1]

        IN_pad = max(8, -(-in_dim // 8) * 8)
        CHUNK = 128

        # Lane tile: large blocks for DMA efficiency, but keep >= 2 grid steps so
        # the "parallel" axis can shard across v7x's two TensorCores.
        n128 = -(-N // 128) * 128
        TN = min(1024, max(CHUNK, (n128 // 2) // CHUNK * CHUNK))
        N_pad = -(-N // TN) * TN
        num_chunks = TN // CHUNK
        grid = (N_pad // TN,)

        # input laid out per channel (no out_dim expansion on the host)
        xin = jnp.transpose(x, (0, 2, 3, 1)).reshape(N, C).astype(jnp.float32)  # (N, in_dim)
        x_p = jnp.zeros((IN_pad, N_pad), jnp.float32).at[:in_dim, :N].set(xin.T)

        # per-channel extended grid (grid rows are shared across out_dim here)
        grid_ch = self.grid.reshape(out_dim, in_dim, num + 1)[0]                # (in_dim, num+1)
        gext = _extend_grid(grid_ch, k)                                         # (in_dim, G_ext)
        G_ext = gext.shape[1]
        n_basis0 = G_ext - 1
        gext_p = jnp.zeros((IN_pad, G_ext), jnp.float32).at[:in_dim].set(gext)
        gext_p = gext_p.at[in_dim:].set(gext[0])     # valid knots in pad rows (finite recips)

        # divide-free recursion constants:  t1 = (x - g[b])/(g[b+d]-g[b]) = x*rcp + off
        rcp_cols, off_cols = [], []
        for d in range(1, k + 1):
            for b in range(n_basis0 - d + 1):
                r = 1.0 / (gext_p[:, b + d] - gext_p[:, b])
                rcp_cols.append(r)
                off_cols.append(-gext_p[:, b] * r)
        rcp_p = jnp.stack(rcp_cols, axis=1)          # (IN_pad, n_t1)
        off_p = jnp.stack(off_cols, axis=1)          # (IN_pad, n_t1)

        # coef / (mask*scale_base) / (mask*scale_sp) arranged in out_dim bands of IN_pad rows
        coef_b = jnp.pad(self.coef.reshape(out_dim, in_dim, n_coef),
                         ((0, 0), (0, IN_pad - in_dim), (0, 0))
                         ).reshape(out_dim * IN_pad, n_coef)
        prm = jnp.stack([self.mask * self.scale_base,
                         self.mask * self.scale_sp], axis=1)                    # (size, 2)
        prm_b = jnp.pad(prm.reshape(out_dim, in_dim, 2),
                        ((0, 0), (0, IN_pad - in_dim), (0, 0))
                        ).reshape(out_dim * IN_pad, 2)

        kernel = functools.partial(
            kan_kernel, k=k, n_basis0=n_basis0, out_dim=out_dim, in_dim=in_dim,
            in_pad=IN_pad, chunk=CHUNK, num_chunks=num_chunks,
            emit_intermediates=return_intermediates)

        in_specs = [
            pl.BlockSpec((IN_pad, TN), lambda i: (0, i)),
            pl.BlockSpec((IN_pad, G_ext), lambda i: (0, 0)),
            pl.BlockSpec((IN_pad, rcp_p.shape[1]), lambda i: (0, 0)),
            pl.BlockSpec((IN_pad, off_p.shape[1]), lambda i: (0, 0)),
            pl.BlockSpec((out_dim * IN_pad, n_coef), lambda i: (0, 0)),
            pl.BlockSpec((out_dim * IN_pad, 2), lambda i: (0, 0)),
        ]
        y_shape = jax.ShapeDtypeStruct((out_dim, N_pad), jnp.float32)
        y_spec = pl.BlockSpec((out_dim, TN), lambda i: (0, i))
        if return_intermediates:
            out_shape = (
                jax.ShapeDtypeStruct((out_dim, in_dim, N_pad), jnp.float32),
                jax.ShapeDtypeStruct((out_dim, in_dim, N_pad), jnp.float32),
                y_shape,
            )
            out_specs = (
                pl.BlockSpec((out_dim, in_dim, TN), lambda i: (0, 0, i)),
                pl.BlockSpec((out_dim, in_dim, TN), lambda i: (0, 0, i)),
                y_spec,
            )
        else:
            out_shape = y_shape
            out_specs = y_spec

        result = pl.pallas_call(
            kernel,
            out_shape=out_shape,
            grid=grid,
            in_specs=in_specs,
            out_specs=out_specs,
            compiler_params=pltpu.CompilerParams(dimension_semantics=("parallel",)),
        )(x_p, gext_p, rcp_p, off_p, coef_b, prm_b)

        if return_intermediates:
            spline_p, act_p, y_p = result
        else:
            y_p = result

        y = y_p[:, :N]                                                   # (out_dim, N)
        y_out = y.T.reshape(B, H, W, out_dim).transpose(0, 3, 1, 2)      # NCHW

        if not return_intermediates:
            return y_out

        preacts = jnp.broadcast_to(xin[:, None, :], (N, out_dim, in_dim))
        postspline = jnp.transpose(spline_p[:, :, :N], (2, 0, 1))        # (N, out_dim, in_dim)
        postacts = jnp.transpose(act_p[:, :, :N], (2, 0, 1))
        return y_out, preacts, postacts, postspline


# ----------------------------------------------------------------------------
# pure-JAX reference (correctness check only)
# ----------------------------------------------------------------------------
def reference_forward(layer, x):
    B, C, H, W = x.shape
    N = B * H * W
    xin = jnp.transpose(x, (0, 2, 3, 1)).reshape(N, C).astype(jnp.float32)
    xs = jnp.tile(xin.T, (layer.out_dim, 1))                    # (size, N)
    Bk = _b_batch_ref(xs, layer.grid, layer.k)                  # (size, num+k, N)
    spline = jnp.einsum('sb,sbn->sn', layer.coef, Bk)
    base = xs * jax.nn.sigmoid(xs)
    act = layer.mask[:, None] * (layer.scale_base[:, None] * base
                                 + layer.scale_sp[:, None] * spline)
    y = act.reshape(layer.out_dim, layer.in_dim, N).sum(axis=1)
    y_out = y.T.reshape(B, H, W, layer.out_dim).transpose(0, 3, 1, 2)
    postacts = act.T.reshape(N, layer.out_dim, layer.in_dim)
    postspline = spline.T.reshape(N, layer.out_dim, layer.in_dim)
    return y_out, postacts, postspline


if __name__ == "__main__":
    key = jax.random.PRNGKey(0)
    k_noise, k_x = jax.random.split(key)

    in_dim, out_dim = 4, 2
    layer = KANLayerPallas(in_dim=in_dim, out_dim=out_dim, num=5, k=3, key=k_noise)

    x = jax.random.uniform(k_x, (2, in_dim, 16, 16), dtype=jnp.float32,
                           minval=-1.0, maxval=1.0)

    y, preacts, postacts, postspline = layer(x)
    jax.block_until_ready((y, preacts, postacts, postspline))

    # y-only fast path (no spline/act writebacks)
    y_fast = layer(x, return_intermediates=False)
    jax.block_until_ready(y_fast)

    y_ref, postacts_ref, postspline_ref = reference_forward(layer, x)
    assert y.shape == (2, out_dim, 16, 16)
    assert preacts.shape == (2 * 16 * 16, out_dim, in_dim)
    assert jnp.allclose(y, y_ref, atol=1e-4), "y mismatch"
    assert jnp.allclose(y_fast, y_ref, atol=1e-4), "y (fast path) mismatch"
    assert jnp.allclose(postacts, postacts_ref, atol=1e-4), "postacts mismatch"
    assert jnp.allclose(postspline, postspline_ref, atol=1e-4), "postspline mismatch"

    print("KERNEL_OK")
</pallas_src>

<mosaic_0001>
module attributes {stable_mosaic.version = 11 : i64} {
  func.func @kan_kernel(%arg0: i32, %arg1: memref<8x256xf32, #tpu.memory_space<vmem>>, %arg2: memref<8x12xf32, #tpu.memory_space<vmem>>, %arg3: memref<8x30xf32, #tpu.memory_space<vmem>>, %arg4: memref<8x30xf32, #tpu.memory_space<vmem>>, %arg5: memref<16x8xf32, #tpu.memory_space<vmem>>, %arg6: memref<16x2xf32, #tpu.memory_space<vmem>>, %arg7: memref<2x4x256xf32, #tpu.memory_space<vmem>>, %arg8: memref<2x4x256xf32, #tpu.memory_space<vmem>>, %arg9: memref<2x256xf32, #tpu.memory_space<vmem>>) attributes {dimension_semantics = [#tpu.dimension_semantics<parallel>], iteration_bounds = array<i64: 2>, scalar_prefetch = 0 : i64, scratch_operands = 0 : i64, tpu.core_type = #tpu.core_type<tc>, window_params = [{transform_indices = @transform_0, window_bounds = array<i64: 8, 256>}, {pipeline_mode = #tpu.pipeline_mode<synchronous>, transform_indices = @transform_1, window_bounds = array<i64: 8, 12>}, {pipeline_mode = #tpu.pipeline_mode<synchronous>, transform_indices = @transform_2, window_bounds = array<i64: 8, 30>}, {pipeline_mode = #tpu.pipeline_mode<synchronous>, transform_indices = @transform_3, window_bounds = array<i64: 8, 30>}, {pipeline_mode = #tpu.pipeline_mode<synchronous>, transform_indices = @transform_4, window_bounds = array<i64: 16, 8>}, {pipeline_mode = #tpu.pipeline_mode<synchronous>, transform_indices = @transform_5, window_bounds = array<i64: 16, 2>}, {transform_indices = @transform_6, window_bounds = array<i64: 2, 4, 256>}, {transform_indices = @transform_7, window_bounds = array<i64: 2, 4, 256>}, {transform_indices = @transform_8, window_bounds = array<i64: 2, 256>}]} {
    %c0 = arith.constant 0 : index
    %c0_0 = arith.constant 0 : index
    %0 = vector.load %arg2[%c0, %c0_0] : memref<8x12xf32, #tpu.memory_space<vmem>>, vector<8x12xf32>
    %c0_1 = arith.constant 0 : index
    %c0_2 = arith.constant 0 : index
    %1 = vector.load %arg3[%c0_1, %c0_2] : memref<8x30xf32, #tpu.memory_space<vmem>>, vector<8x30xf32>
    %c0_3 = arith.constant 0 : index
    %c0_4 = arith.constant 0 : index
    %2 = vector.load %arg4[%c0_3, %c0_4] : memref<8x30xf32, #tpu.memory_space<vmem>>, vector<8x30xf32>
    %c0_5 = arith.constant 0 : index
    %c0_6 = arith.constant 0 : index
    %3 = vector.load %arg5[%c0_5, %c0_6] : memref<16x8xf32, #tpu.memory_space<vmem>>, vector<16x8xf32>
    %c0_7 = arith.constant 0 : index
    %c0_8 = arith.constant 0 : index
    %4 = vector.load %arg6[%c0_7, %c0_8] : memref<16x2xf32, #tpu.memory_space<vmem>>, vector<16x2xf32>
    %5 = vector.extract_strided_slice %0 {offsets = [0, 0], sizes = [8, 1], strides = [1, 1]} : vector<8x12xf32> to vector<8x1xf32>
    %6 = vector.extract_strided_slice %0 {offsets = [0, 1], sizes = [8, 1], strides = [1, 1]} : vector<8x12xf32> to vector<8x1xf32>
    %7 = vector.extract_strided_slice %0 {offsets = [0, 2], sizes = [8, 1], strides = [1, 1]} : vector<8x12xf32> to vector<8x1xf32>
    %8 = vector.extract_strided_slice %0 {offsets = [0, 3], sizes = [8, 1], strides = [1, 1]} : vector<8x12xf32> to vector<8x1xf32>
    %9 = vector.extract_strided_slice %0 {offsets = [0, 4], sizes = [8, 1], strides = [1, 1]} : vector<8x12xf32> to vector<8x1xf32>
    %10 = vector.extract_strided_slice %0 {offsets = [0, 5], sizes = [8, 1], strides = [1, 1]} : vector<8x12xf32> to vector<8x1xf32>
    %11 = vector.extract_strided_slice %0 {offsets = [0, 6], sizes = [8, 1], strides = [1, 1]} : vector<8x12xf32> to vector<8x1xf32>
    %12 = vector.extract_strided_slice %0 {offsets = [0, 7], sizes = [8, 1], strides = [1, 1]} : vector<8x12xf32> to vector<8x1xf32>
    %13 = vector.extract_strided_slice %0 {offsets = [0, 8], sizes = [8, 1], strides = [1, 1]} : vector<8x12xf32> to vector<8x1xf32>
    %14 = vector.extract_strided_slice %0 {offsets = [0, 9], sizes = [8, 1], strides = [1, 1]} : vector<8x12xf32> to vector<8x1xf32>
    %15 = vector.extract_strided_slice %0 {offsets = [0, 10], sizes = [8, 1], strides = [1, 1]} : vector<8x12xf32> to vector<8x1xf32>
    %16 = vector.extract_strided_slice %0 {offsets = [0, 11], sizes = [8, 1], strides = [1, 1]} : vector<8x12xf32> to vector<8x1xf32>
    %17 = vector.extract_strided_slice %1 {offsets = [0, 0], sizes = [8, 1], strides = [1, 1]} : vector<8x30xf32> to vector<8x1xf32>
    %18 = vector.extract_strided_slice %1 {offsets = [0, 1], sizes = [8, 1], strides = [1, 1]} : vector<8x30xf32> to vector<8x1xf32>
    %19 = vector.extract_strided_slice %1 {offsets = [0, 2], sizes = [8, 1], strides = [1, 1]} : vector<8x30xf32> to vector<8x1xf32>
    %20 = vector.extract_strided_slice %1 {offsets = [0, 3], sizes = [8, 1], strides = [1, 1]} : vector<8x30xf32> to vector<8x1xf32>
    %21 = vector.extract_strided_slice %1 {offsets = [0, 4], sizes = [8, 1], strides = [1, 1]} : vector<8x30xf32> to vector<8x1xf32>
    %22 = vector.extract_strided_slice %1 {offsets = [0, 5], sizes = [8, 1], strides = [1, 1]} : vector<8x30xf32> to vector<8x1xf32>
    %23 = vector.extract_strided_slice %1 {offsets = [0, 6], sizes = [8, 1], strides = [1, 1]} : vector<8x30xf32> to vector<8x1xf32>
    %24 = vector.extract_strided_slice %1 {offsets = [0, 7], sizes = [8, 1], strides = [1, 1]} : vector<8x30xf32> to vector<8x1xf32>
    %25 = vector.extract_strided_slice %1 {offsets = [0, 8], sizes = [8, 1], strides = [1, 1]} : vector<8x30xf32> to vector<8x1xf32>
    %26 = vector.extract_strided_slice %1 {offsets = [0, 9], sizes = [8, 1], strides = [1, 1]} : vector<8x30xf32> to vector<8x1xf32>
    %27 = vector.extract_strided_slice %1 {offsets = [0, 10], sizes = [8, 1], strides = [1, 1]} : vector<8x30xf32> to vector<8x1xf32>
    %28 = vector.extract_strided_slice %1 {offsets = [0, 11], sizes = [8, 1], strides = [1, 1]} : vector<8x30xf32> to vector<8x1xf32>
    %29 = vector.extract_strided_slice %1 {offsets = [0, 12], sizes = [8, 1], strides = [1, 1]} : vector<8x30xf32> to vector<8x1xf32>
    %30 = vector.extract_strided_slice %1 {offsets = [0, 13], sizes = [8, 1], strides = [1, 1]} : vector<8x30xf32> to vector<8x1xf32>
    %31 = vector.extract_strided_slice %1 {offsets = [0, 14], sizes = [8, 1], strides = [1, 1]} : vector<8x30xf32> to vector<8x1xf32>
    %32 = vector.extract_strided_slice %1 {offsets = [0, 15], sizes = [8, 1], strides = [1, 1]} : vector<8x30xf32> to vector<8x1xf32>
    %33 = vector.extract_strided_slice %1 {offsets = [0, 16], sizes = [8, 1], strides = [1, 1]} : vector<8x30xf32> to vector<8x1xf32>
    %34 = vector.extract_strided_slice %1 {offsets = [0, 17], sizes = [8, 1], strides = [1, 1]} : vector<8x30xf32> to vector<8x1xf32>
    %35 = vector.extract_strided_slice %1 {offsets = [0, 18], sizes = [8, 1], strides = [1, 1]} : vector<8x30xf32> to vector<8x1xf32>
    %36 = vector.extract_strided_slice %1 {offsets = [0, 19], sizes = [8, 1], strides = [1, 1]} : vector<8x30xf32> to vector<8x1xf32>
    %37 = vector.extract_strided_slice %1 {offsets = [0, 20], sizes = [8, 1], strides = [1, 1]} : vector<8x30xf32> to vector<8x1xf32>
    %38 = vector.extract_strided_slice %1 {offsets = [0, 21], sizes = [8, 1], strides = [1, 1]} : vector<8x30xf32> to vector<8x1xf32>
    %39 = vector.extract_strided_slice %1 {offsets = [0, 22], sizes = [8, 1], strides = [1, 1]} : vector<8x30xf32> to vector<8x1xf32>
    %40 = vector.extract_strided_slice %1 {offsets = [0, 23], sizes = [8, 1], strides = [1, 1]} : vector<8x30xf32> to vector<8x1xf32>
    %41 = vector.extract_strided_slice %1 {offsets = [0, 24], sizes = [8, 1], strides = [1, 1]} : vector<8x30xf32> to vector<8x1xf32>
    %42 = vector.extract_strided_slice %1 {offsets = [0, 25], sizes = [8, 1], strides = [1, 1]} : vector<8x30xf32> to vector<8x1xf32>
    %43 = vector.extract_strided_slice %1 {offsets = [0, 26], sizes = [8, 1], strides = [1, 1]} : vector<8x30xf32> to vector<8x1xf32>
    %44 = vector.extract_strided_slice %1 {offsets = [0, 27], sizes = [8, 1], strides = [1, 1]} : vector<8x30xf32> to vector<8x1xf32>
    %45 = vector.extract_strided_slice %1 {offsets = [0, 28], sizes = [8, 1], strides = [1, 1]} : vector<8x30xf32> to vector<8x1xf32>
    %46 = vector.extract_strided_slice %1 {offsets = [0, 29], sizes = [8, 1], strides = [1, 1]} : vector<8x30xf32> to vector<8x1xf32>
    %47 = vector.extract_strided_slice %2 {offsets = [0, 0], sizes = [8, 1], strides = [1, 1]} : vector<8x30xf32> to vector<8x1xf32>
    %48 = vector.extract_strided_slice %2 {offsets = [0, 1], sizes = [8, 1], strides = [1, 1]} : vector<8x30xf32> to vector<8x1xf32>
    %49 = vector.extract_strided_slice %2 {offsets = [0, 2], sizes = [8, 1], strides = [1, 1]} : vector<8x30xf32> to vector<8x1xf32>
    %50 = vector.extract_strided_slice %2 {offsets = [0, 3], sizes = [8, 1], strides = [1, 1]} : vector<8x30xf32> to vector<8x1xf32>
    %51 = vector.extract_strided_slice %2 {offsets = [0, 4], sizes = [8, 1], strides = [1, 1]} : vector<8x30xf32> to vector<8x1xf32>
    %52 = vector.extract_strided_slice %2 {offsets = [0, 5], sizes = [8, 1], strides = [1, 1]} : vector<8x30xf32> to vector<8x1xf32>
    %53 = vector.extract_strided_slice %2 {offsets = [0, 6], sizes = [8, 1], strides = [1, 1]} : vector<8x30xf32> to vector<8x1xf32>
    %54 = vector.extract_strided_slice %2 {offsets = [0, 7], sizes = [8, 1], strides = [1, 1]} : vector<8x30xf32> to vector<8x1xf32>
    %55 = vector.extract_strided_slice %2 {offsets = [0, 8], sizes = [8, 1], strides = [1, 1]} : vector<8x30xf32> to vector<8x1xf32>
    %56 = vector.extract_strided_slice %2 {offsets = [0, 9], sizes = [8, 1], strides = [1, 1]} : vector<8x30xf32> to vector<8x1xf32>
    %57 = vector.extract_strided_slice %2 {offsets = [0, 10], sizes = [8, 1], strides = [1, 1]} : vector<8x30xf32> to vector<8x1xf32>
    %58 = vector.extract_strided_slice %2 {offsets = [0, 11], sizes = [8, 1], strides = [1, 1]} : vector<8x30xf32> to vector<8x1xf32>
    %59 = vector.extract_strided_slice %2 {offsets = [0, 12], sizes = [8, 1], strides = [1, 1]} : vector<8x30xf32> to vector<8x1xf32>
    %60 = vector.extract_strided_slice %2 {offsets = [0, 13], sizes = [8, 1], strides = [1, 1]} : vector<8x30xf32> to vector<8x1xf32>
    %61 = vector.extract_strided_slice %2 {offsets = [0, 14], sizes = [8, 1], strides = [1, 1]} : vector<8x30xf32> to vector<8x1xf32>
    %62 = vector.extract_strided_slice %2 {offsets = [0, 15], sizes = [8, 1], strides = [1, 1]} : vector<8x30xf32> to vector<8x1xf32>
    %63 = vector.extract_strided_slice %2 {offsets = [0, 16], sizes = [8, 1], strides = [1, 1]} : vector<8x30xf32> to vector<8x1xf32>
    %64 = vector.extract_strided_slice %2 {offsets = [0, 17], sizes = [8, 1], strides = [1, 1]} : vector<8x30xf32> to vector<8x1xf32>
    %65 = vector.extract_strided_slice %2 {offsets = [0, 18], sizes = [8, 1], strides = [1, 1]} : vector<8x30xf32> to vector<8x1xf32>
    %66 = vector.extract_strided_slice %2 {offsets = [0, 19], sizes = [8, 1], strides = [1, 1]} : vector<8x30xf32> to vector<8x1xf32>
    %67 = vector.extract_strided_slice %2 {offsets = [0, 20], sizes = [8, 1], strides = [1, 1]} : vector<8x30xf32> to vector<8x1xf32>
    %68 = vector.extract_strided_slice %2 {offsets = [0, 21], sizes = [8, 1], strides = [1, 1]} : vector<8x30xf32> to vector<8x1xf32>
    %69 = vector.extract_strided_slice %2 {offsets = [0, 22], sizes = [8, 1], strides = [1, 1]} : vector<8x30xf32> to vector<8x1xf32>
    %70 = vector.extract_strided_slice %2 {offsets = [0, 23], sizes = [8, 1], strides = [1, 1]} : vector<8x30xf32> to vector<8x1xf32>
    %71 = vector.extract_strided_slice %2 {offsets = [0, 24], sizes = [8, 1], strides = [1, 1]} : vector<8x30xf32> to vector<8x1xf32>
    %72 = vector.extract_strided_slice %2 {offsets = [0, 25], sizes = [8, 1], strides = [1, 1]} : vector<8x30xf32> to vector<8x1xf32>
    %73 = vector.extract_strided_slice %2 {offsets = [0, 26], sizes = [8, 1], strides = [1, 1]} : vector<8x30xf32> to vector<8x1xf32>
    %74 = vector.extract_strided_slice %2 {offsets = [0, 27], sizes = [8, 1], strides = [1, 1]} : vector<8x30xf32> to vector<8x1xf32>
    %75 = vector.extract_strided_slice %2 {offsets = [0, 28], sizes = [8, 1], strides = [1, 1]} : vector<8x30xf32> to vector<8x1xf32>
    %76 = vector.extract_strided_slice %2 {offsets = [0, 29], sizes = [8, 1], strides = [1, 1]} : vector<8x30xf32> to vector<8x1xf32>
    %77 = vector.extract_strided_slice %3 {offsets = [0, 0], sizes = [8, 1], strides = [1, 1]} : vector<16x8xf32> to vector<8x1xf32>
    %78 = vector.extract_strided_slice %3 {offsets = [0, 1], sizes = [8, 1], strides = [1, 1]} : vector<16x8xf32> to vector<8x1xf32>
    %79 = vector.extract_strided_slice %3 {offsets = [0, 2], sizes = [8, 1], strides = [1, 1]} : vector<16x8xf32> to vector<8x1xf32>
    %80 = vector.extract_strided_slice %3 {offsets = [0, 3], sizes = [8, 1], strides = [1, 1]} : vector<16x8xf32> to vector<8x1xf32>
    %81 = vector.extract_strided_slice %3 {offsets = [0, 4], sizes = [8, 1], strides = [1, 1]} : vector<16x8xf32> to vector<8x1xf32>
    %82 = vector.extract_strided_slice %3 {offsets = [0, 5], sizes = [8, 1], strides = [1, 1]} : vector<16x8xf32> to vector<8x1xf32>
    %83 = vector.extract_strided_slice %3 {offsets = [0, 6], sizes = [8, 1], strides = [1, 1]} : vector<16x8xf32> to vector<8x1xf32>
    %84 = vector.extract_strided_slice %3 {offsets = [0, 7], sizes = [8, 1], strides = [1, 1]} : vector<16x8xf32> to vector<8x1xf32>
    %85 = vector.extract_strided_slice %3 {offsets = [8, 0], sizes = [8, 1], strides = [1, 1]} : vector<16x8xf32> to vector<8x1xf32>
    %86 = vector.extract_strided_slice %3 {offsets = [8, 1], sizes = [8, 1], strides = [1, 1]} : vector<16x8xf32> to vector<8x1xf32>
    %87 = vector.extract_strided_slice %3 {offsets = [8, 2], sizes = [8, 1], strides = [1, 1]} : vector<16x8xf32> to vector<8x1xf32>
    %88 = vector.extract_strided_slice %3 {offsets = [8, 3], sizes = [8, 1], strides = [1, 1]} : vector<16x8xf32> to vector<8x1xf32>
    %89 = vector.extract_strided_slice %3 {offsets = [8, 4], sizes = [8, 1], strides = [1, 1]} : vector<16x8xf32> to vector<8x1xf32>
    %90 = vector.extract_strided_slice %3 {offsets = [8, 5], sizes = [8, 1], strides = [1, 1]} : vector<16x8xf32> to vector<8x1xf32>
    %91 = vector.extract_strided_slice %3 {offsets = [8, 6], sizes = [8, 1], strides = [1, 1]} : vector<16x8xf32> to vector<8x1xf32>
    %92 = vector.extract_strided_slice %3 {offsets = [8, 7], sizes = [8, 1], strides = [1, 1]} : vector<16x8xf32> to vector<8x1xf32>
    %93 = vector.extract_strided_slice %4 {offsets = [0, 0], sizes = [8, 1], strides = [1, 1]} : vector<16x2xf32> to vector<8x1xf32>
    %94 = vector.extract_strided_slice %4 {offsets = [8, 0], sizes = [8, 1], strides = [1, 1]} : vector<16x2xf32> to vector<8x1xf32>
    %95 = vector.extract_strided_slice %4 {offsets = [0, 1], sizes = [8, 1], strides = [1, 1]} : vector<16x2xf32> to vector<8x1xf32>
    %96 = vector.extract_strided_slice %4 {offsets = [8, 1], sizes = [8, 1], strides = [1, 1]} : vector<16x2xf32> to vector<8x1xf32>
    %c0_i32 = arith.constant 0 : i32
    %c128_i32 = arith.constant 128 : i32
    %97 = arith.muli %c0_i32, %c128_i32 : i32
    %98 = tpu.assume_multiple %97, 128 : i32
    %c0_9 = arith.constant 0 : index
    %99 = arith.index_cast %98 : i32 to index
    %100 = vector.load %arg1[%c0_9, %99] : memref<8x256xf32, #tpu.memory_space<vmem>>, vector<8x128xf32>
    %101 = vector.broadcast %5 : vector<8x1xf32> to vector<8x128xf32>
    %102 = arith.cmpf oge, %100, %101 : vector<8x128xf32>
    %103 = vector.broadcast %6 : vector<8x1xf32> to vector<8x128xf32>
    %104 = arith.cmpf oge, %100, %103 : vector<8x128xf32>
    %105 = vector.broadcast %7 : vector<8x1xf32> to vector<8x128xf32>
    %106 = arith.cmpf oge, %100, %105 : vector<8x128xf32>
    %107 = vector.broadcast %8 : vector<8x1xf32> to vector<8x128xf32>
    %108 = arith.cmpf oge, %100, %107 : vector<8x128xf32>
    %109 = vector.broadcast %9 : vector<8x1xf32> to vector<8x128xf32>
    %110 = arith.cmpf oge, %100, %109 : vector<8x128xf32>
    %111 = vector.broadcast %10 : vector<8x1xf32> to vector<8x128xf32>
    %112 = arith.cmpf oge, %100, %111 : vector<8x128xf32>
    %113 = vector.broadcast %11 : vector<8x1xf32> to vector<8x128xf32>
    %114 = arith.cmpf oge, %100, %113 : vector<8x128xf32>
    %115 = vector.broadcast %12 : vector<8x1xf32> to vector<8x128xf32>
    %116 = arith.cmpf oge, %100, %115 : vector<8x128xf32>
    %117 = vector.broadcast %13 : vector<8x1xf32> to vector<8x128xf32>
    %118 = arith.cmpf oge, %100, %117 : vector<8x128xf32>
    %119 = vector.broadcast %14 : vector<8x1xf32> to vector<8x128xf32>
    %120 = arith.cmpf oge, %100, %119 : vector<8x128xf32>
    %121 = vector.broadcast %15 : vector<8x1xf32> to vector<8x128xf32>
    %122 = arith.cmpf oge, %100, %121 : vector<8x128xf32>
    %123 = vector.broadcast %16 : vector<8x1xf32> to vector<8x128xf32>
    %124 = arith.cmpf oge, %100, %123 : vector<8x128xf32>
    %cst = arith.constant dense<true> : vector<8x128xi1>
    %125 = arith.xori %104, %cst : vector<8x128xi1>
    %126 = arith.andi %102, %125 : vector<8x128xi1>
    %127 = arith.extui %126 : vector<8x128xi1> to vector<8x128xi32>
    %128 = arith.sitofp %127 : vector<8x128xi32> to vector<8x128xf32>
    %cst_10 = arith.constant dense<true> : vector<8x128xi1>
    %129 = arith.xori %106, %cst_10 : vector<8x128xi1>
    %130 = arith.andi %104, %129 : vector<8x128xi1>
    %131 = arith.extui %130 : vector<8x128xi1> to vector<8x128xi32>
    %132 = arith.sitofp %131 : vector<8x128xi32> to vector<8x128xf32>
    %cst_11 = arith.constant dense<true> : vector<8x128xi1>
    %133 = arith.xori %108, %cst_11 : vector<8x128xi1>
    %134 = arith.andi %106, %133 : vector<8x128xi1>
    %135 = arith.extui %134 : vector<8x128xi1> to vector<8x128xi32>
    %136 = arith.sitofp %135 : vector<8x128xi32> to vector<8x128xf32>
    %cst_12 = arith.constant dense<true> : vector<8x128xi1>
    %137 = arith.xori %110, %cst_12 : vector<8x128xi1>
    %138 = arith.andi %108, %137 : vector<8x128xi1>
    %139 = arith.extui %138 : vector<8x128xi1> to vector<8x128xi32>
    %140 = arith.sitofp %139 : vector<8x128xi32> to vector<8x128xf32>
    %cst_13 = arith.constant dense<true> : vector<8x128xi1>
    %141 = arith.xori %112, %cst_13 : vector<8x128xi1>
    %142 = arith.andi %110, %141 : vector<8x128xi1>
    %143 = arith.extui %142 : vector<8x128xi1> to vector<8x128xi32>
    %144 = arith.sitofp %143 : vector<8x128xi32> to vector<8x128xf32>
    %cst_14 = arith.constant dense<true> : vector<8x128xi1>
    %145 = arith.xori %114, %cst_14 : vector<8x128xi1>
    %146 = arith.andi %112, %145 : vector<8x128xi1>
    %147 = arith.extui %146 : vector<8x128xi1> to vector<8x128xi32>
    %148 = arith.sitofp %147 : vector<8x128xi32> to vector<8x128xf32>
    %cst_15 = arith.constant dense<true> : vector<8x128xi1>
    %149 = arith.xori %116, %cst_15 : vector<8x128xi1>
    %150 = arith.andi %114, %149 : vector<8x128xi1>
    %151 = arith.extui %150 : vector<8x128xi1> to vector<8x128xi32>
    %152 = arith.sitofp %151 : vector<8x128xi32> to vector<8x128xf32>
    %cst_16 = arith.constant dense<true> : vector<8x128xi1>
    %153 = arith.xori %118, %cst_16 : vector<8x128xi1>
    %154 = arith.andi %116, %153 : vector<8x128xi1>
    %155 = arith.extui %154 : vector<8x128xi1> to vector<8x128xi32>
    %156 = arith.sitofp %155 : vector<8x128xi32> to vector<8x128xf32>
    %cst_17 = arith.constant dense<true> : vector<8x128xi1>
    %157 = arith.xori %120, %cst_17 : vector<8x128xi1>
    %158 = arith.andi %118, %157 : vector<8x128xi1>
    %159 = arith.extui %158 : vector<8x128xi1> to vector<8x128xi32>
    %160 = arith.sitofp %159 : vector<8x128xi32> to vector<8x128xf32>
    %cst_18 = arith.constant dense<true> : vector<8x128xi1>
    %161 = arith.xori %122, %cst_18 : vector<8x128xi1>
    %162 = arith.andi %120, %161 : vector<8x128xi1>
    %163 = arith.extui %162 : vector<8x128xi1> to vector<8x128xi32>
    %164 = arith.sitofp %163 : vector<8x128xi32> to vector<8x128xf32>
    %cst_19 = arith.constant dense<true> : vector<8x128xi1>
    %165 = arith.xori %124, %cst_19 : vector<8x128xi1>
    %166 = arith.andi %122, %165 : vector<8x128xi1>
    %167 = arith.extui %166 : vector<8x128xi1> to vector<8x128xi32>
    %168 = arith.sitofp %167 : vector<8x128xi32> to vector<8x128xf32>
    %169 = vector.broadcast %17 : vector<8x1xf32> to vector<8x128xf32>
    %170 = arith.mulf %100, %169 : vector<8x128xf32>
    %171 = vector.broadcast %47 : vector<8x1xf32> to vector<8x128xf32>
    %172 = arith.addf %170, %171 : vector<8x128xf32>
    %173 = vector.broadcast %18 : vector<8x1xf32> to vector<8x128xf32>
    %174 = arith.mulf %100, %173 : vector<8x128xf32>
    %175 = vector.broadcast %48 : vector<8x1xf32> to vector<8x128xf32>
    %176 = arith.addf %174, %175 : vector<8x128xf32>
    %177 = vector.broadcast %19 : vector<8x1xf32> to vector<8x128xf32>
    %178 = arith.mulf %100, %177 : vector<8x128xf32>
    %179 = vector.broadcast %49 : vector<8x1xf32> to vector<8x128xf32>
    %180 = arith.addf %178, %179 : vector<8x128xf32>
    %181 = vector.broadcast %20 : vector<8x1xf32> to vector<8x128xf32>
    %182 = arith.mulf %100, %181 : vector<8x128xf32>
    %183 = vector.broadcast %50 : vector<8x1xf32> to vector<8x128xf32>
    %184 = arith.addf %182, %183 : vector<8x128xf32>
    %185 = vector.broadcast %21 : vector<8x1xf32> to vector<8x128xf32>
    %186 = arith.mulf %100, %185 : vector<8x128xf32>
    %187 = vector.broadcast %51 : vector<8x1xf32> to vector<8x128xf32>
    %188 = arith.addf %186, %187 : vector<8x128xf32>
    %189 = vector.broadcast %22 : vector<8x1xf32> to vector<8x128xf32>
    %190 = arith.mulf %100, %189 : vector<8x128xf32>
    %191 = vector.broadcast %52 : vector<8x1xf32> to vector<8x128xf32>
    %192 = arith.addf %190, %191 : vector<8x128xf32>
    %193 = vector.broadcast %23 : vector<8x1xf32> to vector<8x128xf32>
    %194 = arith.mulf %100, %193 : vector<8x128xf32>
    %195 = vector.broadcast %53 : vector<8x1xf32> to vector<8x128xf32>
    %196 = arith.addf %194, %195 : vector<8x128xf32>
    %197 = vector.broadcast %24 : vector<8x1xf32> to vector<8x128xf32>
    %198 = arith.mulf %100, %197 : vector<8x128xf32>
    %199 = vector.broadcast %54 : vector<8x1xf32> to vector<8x128xf32>
    %200 = arith.addf %198, %199 : vector<8x128xf32>
    %201 = vector.broadcast %25 : vector<8x1xf32> to vector<8x128xf32>
    %202 = arith.mulf %100, %201 : vector<8x128xf32>
    %203 = vector.broadcast %55 : vector<8x1xf32> to vector<8x128xf32>
    %204 = arith.addf %202, %203 : vector<8x128xf32>
    %205 = vector.broadcast %26 : vector<8x1xf32> to vector<8x128xf32>
    %206 = arith.mulf %100, %205 : vector<8x128xf32>
    %207 = vector.broadcast %56 : vector<8x1xf32> to vector<8x128xf32>
    %208 = arith.addf %206, %207 : vector<8x128xf32>
    %209 = vector.broadcast %27 : vector<8x1xf32> to vector<8x128xf32>
    %210 = arith.mulf %100, %209 : vector<8x128xf32>
    %211 = vector.broadcast %57 : vector<8x1xf32> to vector<8x128xf32>
    %212 = arith.addf %210, %211 : vector<8x128xf32>
    %213 = arith.mulf %172, %128 : vector<8x128xf32>
    %cst_20 = arith.constant 1.000000e+00 : f32
    %214 = vector.broadcast %cst_20 : f32 to vector<8x128xf32>
    %215 = arith.subf %214, %176 : vector<8x128xf32>
    %216 = arith.mulf %215, %132 : vector<8x128xf32>
    %217 = arith.addf %213, %216 : vector<8x128xf32>
    %218 = arith.mulf %176, %132 : vector<8x128xf32>
    %cst_21 = arith.constant 1.000000e+00 : f32
    %219 = vector.broadcast %cst_21 : f32 to vector<8x128xf32>
    %220 = arith.subf %219, %180 : vector<8x128xf32>
    %221 = arith.mulf %220, %136 : vector<8x128xf32>
    %222 = arith.addf %218, %221 : vector<8x128xf32>
    %223 = arith.mulf %180, %136 : vector<8x128xf32>
    %cst_22 = arith.constant 1.000000e+00 : f32
    %224 = vector.broadcast %cst_22 : f32 to vector<8x128xf32>
    %225 = arith.subf %224, %184 : vector<8x128xf32>
    %226 = arith.mulf %225, %140 : vector<8x128xf32>
    %227 = arith.addf %223, %226 : vector<8x128xf32>
    %228 = arith.mulf %184, %140 : vector<8x128xf32>
    %cst_23 = arith.constant 1.000000e+00 : f32
    %229 = vector.broadcast %cst_23 : f32 to vector<8x128xf32>
    %230 = arith.subf %229, %188 : vector<8x128xf32>
    %231 = arith.mulf %230, %144 : vector<8x128xf32>
    %232 = arith.addf %228, %231 : vector<8x128xf32>
    %233 = arith.mulf %188, %144 : vector<8x128xf32>
    %cst_24 = arith.constant 1.000000e+00 : f32
    %234 = vector.broadcast %cst_24 : f32 to vector<8x128xf32>
    %235 = arith.subf %234, %192 : vector<8x128xf32>
    %236 = arith.mulf %235, %148 : vector<8x128xf32>
    %237 = arith.addf %233, %236 : vector<8x128xf32>
    %238 = arith.mulf %192, %148 : vector<8x128xf32>
    %cst_25 = arith.constant 1.000000e+00 : f32
    %239 = vector.broadcast %cst_25 : f32 to vector<8x128xf32>
    %240 = arith.subf %239, %196 : vector<8x128xf32>
    %241 = arith.mulf %240, %152 : vector<8x128xf32>
    %242 = arith.addf %238, %241 : vector<8x128xf32>
    %243 = arith.mulf %196, %152 : vector<8x128xf32>
    %cst_26 = arith.constant 1.000000e+00 : f32
    %244 = vector.broadcast %cst_26 : f32 to vector<8x128xf32>
    %245 = arith.subf %244, %200 : vector<8x128xf32>
    %246 = arith.mulf %245, %156 : vector<8x128xf32>
    %247 = arith.addf %243, %246 : vector<8x128xf32>
    %248 = arith.mulf %200, %156 : vector<8x128xf32>
    %cst_27 = arith.constant 1.000000e+00 : f32
    %249 = vector.broadcast %cst_27 : f32 to vector<8x128xf32>
    %250 = arith.subf %249, %204 : vector<8x128xf32>
    %251 = arith.mulf %250, %160 : vector<8x128xf32>
    %252 = arith.addf %248, %251 : vector<8x128xf32>
    %253 = arith.mulf %204, %160 : vector<8x128xf32>
    %cst_28 = arith.constant 1.000000e+00 : f32
    %254 = vector.broadcast %cst_28 : f32 to vector<8x128xf32>
    %255 = arith.subf %254, %208 : vector<8x128xf32>
    %256 = arith.mulf %255, %164 : vector<8x128xf32>
    %257 = arith.addf %253, %256 : vector<8x128xf32>
    %258 = arith.mulf %208, %164 : vector<8x128xf32>
    %cst_29 = arith.constant 1.000000e+00 : f32
    %259 = vector.broadcast %cst_29 : f32 to vector<8x128xf32>
    %260 = arith.subf %259, %212 : vector<8x128xf32>
    %261 = arith.mulf %260, %168 : vector<8x128xf32>
    %262 = arith.addf %258, %261 : vector<8x128xf32>
    %263 = vector.broadcast %28 : vector<8x1xf32> to vector<8x128xf32>
    %264 = arith.mulf %100, %263 : vector<8x128xf32>
    %265 = vector.broadcast %58 : vector<8x1xf32> to vector<8x128xf32>
    %266 = arith.addf %264, %265 : vector<8x128xf32>
    %267 = vector.broadcast %29 : vector<8x1xf32> to vector<8x128xf32>
    %268 = arith.mulf %100, %267 : vector<8x128xf32>
    %269 = vector.broadcast %59 : vector<8x1xf32> to vector<8x128xf32>
    %270 = arith.addf %268, %269 : vector<8x128xf32>
    %271 = vector.broadcast %30 : vector<8x1xf32> to vector<8x128xf32>
    %272 = arith.mulf %100, %271 : vector<8x128xf32>
    %273 = vector.broadcast %60 : vector<8x1xf32> to vector<8x128xf32>
    %274 = arith.addf %272, %273 : vector<8x128xf32>
    %275 = vector.broadcast %31 : vector<8x1xf32> to vector<8x128xf32>
    %276 = arith.mulf %100, %275 : vector<8x128xf32>
    %277 = vector.broadcast %61 : vector<8x1xf32> to vector<8x128xf32>
    %278 = arith.addf %276, %277 : vector<8x128xf32>
    %279 = vector.broadcast %32 : vector<8x1xf32> to vector<8x128xf32>
    %280 = arith.mulf %100, %279 : vector<8x128xf32>
    %281 = vector.broadcast %62 : vector<8x1xf32> to vector<8x128xf32>
    %282 = arith.addf %280, %281 : vector<8x128xf32>
    %283 = vector.broadcast %33 : vector<8x1xf32> to vector<8x128xf32>
    %284 = arith.mulf %100, %283 : vector<8x128xf32>
    %285 = vector.broadcast %63 : vector<8x1xf32> to vector<8x128xf32>
    %286 = arith.addf %284, %285 : vector<8x128xf32>
    %287 = vector.broadcast %34 : vector<8x1xf32> to vector<8x128xf32>
    %288 = arith.mulf %100, %287 : vector<8x128xf32>
    %289 = vector.broadcast %64 : vector<8x1xf32> to vector<8x128xf32>
    %290 = arith.addf %288, %289 : vector<8x128xf32>
    %291 = vector.broadcast %35 : vector<8x1xf32> to vector<8x128xf32>
    %292 = arith.mulf %100, %291 : vector<8x128xf32>
    %293 = vector.broadcast %65 : vector<8x1xf32> to vector<8x128xf32>
    %294 = arith.addf %292, %293 : vector<8x128xf32>
    %295 = vector.broadcast %36 : vector<8x1xf32> to vector<8x128xf32>
    %296 = arith.mulf %100, %295 : vector<8x128xf32>
    %297 = vector.broadcast %66 : vector<8x1xf32> to vector<8x128xf32>
    %298 = arith.addf %296, %297 : vector<8x128xf32>
    %299 = vector.broadcast %37 : vector<8x1xf32> to vector<8x128xf32>
    %300 = arith.mulf %100, %299 : vector<8x128xf32>
    %301 = vector.broadcast %67 : vector<8x1xf32> to vector<8x128xf32>
    %302 = arith.addf %300, %301 : vector<8x128xf32>
    %303 = arith.mulf %266, %217 : vector<8x128xf32>
    %cst_30 = arith.constant 1.000000e+00 : f32
    %304 = vector.broadcast %cst_30 : f32 to vector<8x128xf32>
    %305 = arith.subf %304, %270 : vector<8x128xf32>
    %306 = arith.mulf %305, %222 : vector<8x128xf32>
    %307 = arith.addf %303, %306 : vector<8x128xf32>
    %308 = arith.mulf %270, %222 : vector<8x128xf32>
    %cst_31 = arith.constant 1.000000e+00 : f32
    %309 = vector.broadcast %cst_31 : f32 to vector<8x128xf32>
    %310 = arith.subf %309, %274 : vector<8x128xf32>
    %311 = arith.mulf %310, %227 : vector<8x128xf32>
    %312 = arith.addf %308, %311 : vector<8x128xf32>
    %313 = arith.mulf %274, %227 : vector<8x128xf32>
    %cst_32 = arith.constant 1.000000e+00 : f32
    %314 = vector.broadcast %cst_32 : f32 to vector<8x128xf32>
    %315 = arith.subf %314, %278 : vector<8x128xf32>
    %316 = arith.mulf %315, %232 : vector<8x128xf32>
    %317 = arith.addf %313, %316 : vector<8x128xf32>
    %318 = arith.mulf %278, %232 : vector<8x128xf32>
    %cst_33 = arith.constant 1.000000e+00 : f32
    %319 = vector.broadcast %cst_33 : f32 to vector<8x128xf32>
    %320 = arith.subf %319, %282 : vector<8x128xf32>
    %321 = arith.mulf %320, %237 : vector<8x128xf32>
    %322 = arith.addf %318, %321 : vector<8x128xf32>
    %323 = arith.mulf %282, %237 : vector<8x128xf32>
    %cst_34 = arith.constant 1.000000e+00 : f32
    %324 = vector.broadcast %cst_34 : f32 to vector<8x128xf32>
    %325 = arith.subf %324, %286 : vector<8x128xf32>
    %326 = arith.mulf %325, %242 : vector<8x128xf32>
    %327 = arith.addf %323, %326 : vector<8x128xf32>
    %328 = arith.mulf %286, %242 : vector<8x128xf32>
    %cst_35 = arith.constant 1.000000e+00 : f32
    %329 = vector.broadcast %cst_35 : f32 to vector<8x128xf32>
    %330 = arith.subf %329, %290 : vector<8x128xf32>
    %331 = arith.mulf %330, %247 : vector<8x128xf32>
    %332 = arith.addf %328, %331 : vector<8x128xf32>
    %333 = arith.mulf %290, %247 : vector<8x128xf32>
    %cst_36 = arith.constant 1.000000e+00 : f32
    %334 = vector.broadcast %cst_36 : f32 to vector<8x128xf32>
    %335 = arith.subf %334, %294 : vector<8x128xf32>
    %336 = arith.mulf %335, %252 : vector<8x128xf32>
    %337 = arith.addf %333, %336 : vector<8x128xf32>
    %338 = arith.mulf %294, %252 : vector<8x128xf32>
    %cst_37 = arith.constant 1.000000e+00 : f32
    %339 = vector.broadcast %cst_37 : f32 to vector<8x128xf32>
    %340 = arith.subf %339, %298 : vector<8x128xf32>
    %341 = arith.mulf %340, %257 : vector<8x128xf32>
    %342 = arith.addf %338, %341 : vector<8x128xf32>
    %343 = arith.mulf %298, %257 : vector<8x128xf32>
    %cst_38 = arith.constant 1.000000e+00 : f32
    %344 = vector.broadcast %cst_38 : f32 to vector<8x128xf32>
    %345 = arith.subf %344, %302 : vector<8x128xf32>
    %346 = arith.mulf %345, %262 : vector<8x128xf32>
    %347 = arith.addf %343, %346 : vector<8x128xf32>
    %348 = vector.broadcast %38 : vector<8x1xf32> to vector<8x128xf32>
    %349 = arith.mulf %100, %348 : vector<8x128xf32>
    %350 = vector.broadcast %68 : vector<8x1xf32> to vector<8x128xf32>
    %351 = arith.addf %349, %350 : vector<8x128xf32>
    %352 = vector.broadcast %39 : vector<8x1xf32> to vector<8x128xf32>
    %353 = arith.mulf %100, %352 : vector<8x128xf32>
    %354 = vector.broadcast %69 : vector<8x1xf32> to vector<8x128xf32>
    %355 = arith.addf %353, %354 : vector<8x128xf32>
    %356 = vector.broadcast %40 : vector<8x1xf32> to vector<8x128xf32>
    %357 = arith.mulf %100, %356 : vector<8x128xf32>
    %358 = vector.broadcast %70 : vector<8x1xf32> to vector<8x128xf32>
    %359 = arith.addf %357, %358 : vector<8x128xf32>
    %360 = vector.broadcast %41 : vector<8x1xf32> to vector<8x128xf32>
    %361 = arith.mulf %100, %360 : vector<8x128xf32>
    %362 = vector.broadcast %71 : vector<8x1xf32> to vector<8x128xf32>
    %363 = arith.addf %361, %362 : vector<8x128xf32>
    %364 = vector.broadcast %42 : vector<8x1xf32> to vector<8x128xf32>
    %365 = arith.mulf %100, %364 : vector<8x128xf32>
    %366 = vector.broadcast %72 : vector<8x1xf32> to vector<8x128xf32>
    %367 = arith.addf %365, %366 : vector<8x128xf32>
    %368 = vector.broadcast %43 : vector<8x1xf32> to vector<8x128xf32>
    %369 = arith.mulf %100, %368 : vector<8x128xf32>
    %370 = vector.broadcast %73 : vector<8x1xf32> to vector<8x128xf32>
    %371 = arith.addf %369, %370 : vector<8x128xf32>
    %372 = vector.broadcast %44 : vector<8x1xf32> to vector<8x128xf32>
    %373 = arith.mulf %100, %372 : vector<8x128xf32>
    %374 = vector.broadcast %74 : vector<8x1xf32> to vector<8x128xf32>
    %375 = arith.addf %373, %374 : vector<8x128xf32>
    %376 = vector.broadcast %45 : vector<8x1xf32> to vector<8x128xf32>
    %377 = arith.mulf %100, %376 : vector<8x128xf32>
    %378 = vector.broadcast %75 : vector<8x1xf32> to vector<8x128xf32>
    %379 = arith.addf %377, %378 : vector<8x128xf32>
    %380 = vector.broadcast %46 : vector<8x1xf32> to vector<8x128xf32>
    %381 = arith.mulf %100, %380 : vector<8x128xf32>
    %382 = vector.broadcast %76 : vector<8x1xf32> to vector<8x128xf32>
    %383 = arith.addf %381, %382 : vector<8x128xf32>
    %384 = arith.mulf %351, %307 : vector<8x128xf32>
    %cst_39 = arith.constant 1.000000e+00 : f32
    %385 = vector.broadcast %cst_39 : f32 to vector<8x128xf32>
    %386 = arith.subf %385, %355 : vector<8x128xf32>
    %387 = arith.mulf %386, %312 : vector<8x128xf32>
    %388 = arith.addf %384, %387 : vector<8x128xf32>
    %389 = arith.mulf %355, %312 : vector<8x128xf32>
    %cst_40 = arith.constant 1.000000e+00 : f32
    %390 = vector.broadcast %cst_40 : f32 to vector<8x128xf32>
    %391 = arith.subf %390, %359 : vector<8x128xf32>
    %392 = arith.mulf %391, %317 : vector<8x128xf32>
    %393 = arith.addf %389, %392 : vector<8x128xf32>
    %394 = arith.mulf %359, %317 : vector<8x128xf32>
    %cst_41 = arith.constant 1.000000e+00 : f32
    %395 = vector.broadcast %cst_41 : f32 to vector<8x128xf32>
    %396 = arith.subf %395, %363 : vector<8x128xf32>
    %397 = arith.mulf %396, %322 : vector<8x128xf32>
    %398 = arith.addf %394, %397 : vector<8x128xf32>
    %399 = arith.mulf %363, %322 : vector<8x128xf32>
    %cst_42 = arith.constant 1.000000e+00 : f32
    %400 = vector.broadcast %cst_42 : f32 to vector<8x128xf32>
    %401 = arith.subf %400, %367 : vector<8x128xf32>
    %402 = arith.mulf %401, %327 : vector<8x128xf32>
    %403 = arith.addf %399, %402 : vector<8x128xf32>
    %404 = arith.mulf %367, %327 : vector<8x128xf32>
    %cst_43 = arith.constant 1.000000e+00 : f32
    %405 = vector.broadcast %cst_43 : f32 to vector<8x128xf32>
    %406 = arith.subf %405, %371 : vector<8x128xf32>
    %407 = arith.mulf %406, %332 : vector<8x128xf32>
    %408 = arith.addf %404, %407 : vector<8x128xf32>
    %409 = arith.mulf %371, %332 : vector<8x128xf32>
    %cst_44 = arith.constant 1.000000e+00 : f32
    %410 = vector.broadcast %cst_44 : f32 to vector<8x128xf32>
    %411 = arith.subf %410, %375 : vector<8x128xf32>
    %412 = arith.mulf %411, %337 : vector<8x128xf32>
    %413 = arith.addf %409, %412 : vector<8x128xf32>
    %414 = arith.mulf %375, %337 : vector<8x128xf32>
    %cst_45 = arith.constant 1.000000e+00 : f32
    %415 = vector.broadcast %cst_45 : f32 to vector<8x128xf32>
    %416 = arith.subf %415, %379 : vector<8x128xf32>
    %417 = arith.mulf %416, %342 : vector<8x128xf32>
    %418 = arith.addf %414, %417 : vector<8x128xf32>
    %419 = arith.mulf %379, %342 : vector<8x128xf32>
    %cst_46 = arith.constant 1.000000e+00 : f32
    %420 = vector.broadcast %cst_46 : f32 to vector<8x128xf32>
    %421 = arith.subf %420, %383 : vector<8x128xf32>
    %422 = arith.mulf %421, %347 : vector<8x128xf32>
    %423 = arith.addf %419, %422 : vector<8x128xf32>
    %424 = arith.negf %100 : vector<8x128xf32>
    %425 = math.exp %424 : vector<8x128xf32>
    %cst_47 = arith.constant 1.000000e+00 : f32
    %426 = vector.broadcast %cst_47 : f32 to vector<8x128xf32>
    %427 = arith.addf %426, %425 : vector<8x128xf32>
    %428 = arith.divf %426, %427 : vector<8x128xf32>
    %429 = arith.mulf %100, %428 : vector<8x128xf32>
    %430 = vector.broadcast %77 : vector<8x1xf32> to vector<8x128xf32>
    %431 = arith.mulf %430, %388 : vector<8x128xf32>
    %432 = vector.broadcast %78 : vector<8x1xf32> to vector<8x128xf32>
    %433 = arith.mulf %432, %393 : vector<8x128xf32>
    %434 = arith.addf %431, %433 : vector<8x128xf32>
    %435 = vector.broadcast %79 : vector<8x1xf32> to vector<8x128xf32>
    %436 = arith.mulf %435, %398 : vector<8x128xf32>
    %437 = arith.addf %434, %436 : vector<8x128xf32>
    %438 = vector.broadcast %80 : vector<8x1xf32> to vector<8x128xf32>
    %439 = arith.mulf %438, %403 : vector<8x128xf32>
    %440 = arith.addf %437, %439 : vector<8x128xf32>
    %441 = vector.broadcast %81 : vector<8x1xf32> to vector<8x128xf32>
    %442 = arith.mulf %441, %408 : vector<8x128xf32>
    %443 = arith.addf %440, %442 : vector<8x128xf32>
    %444 = vector.broadcast %82 : vector<8x1xf32> to vector<8x128xf32>
    %445 = arith.mulf %444, %413 : vector<8x128xf32>
    %446 = arith.addf %443, %445 : vector<8x128xf32>
    %447 = vector.broadcast %83 : vector<8x1xf32> to vector<8x128xf32>
    %448 = arith.mulf %447, %418 : vector<8x128xf32>
    %449 = arith.addf %446, %448 : vector<8x128xf32>
    %450 = vector.broadcast %84 : vector<8x1xf32> to vector<8x128xf32>
    %451 = arith.mulf %450, %423 : vector<8x128xf32>
    %452 = arith.addf %449, %451 : vector<8x128xf32>
    %453 = vector.broadcast %93 : vector<8x1xf32> to vector<8x128xf32>
    %454 = arith.mulf %453, %429 : vector<8x128xf32>
    %455 = vector.broadcast %95 : vector<8x1xf32> to vector<8x128xf32>
    %456 = arith.mulf %455, %452 : vector<8x128xf32>
    %457 = arith.addf %454, %456 : vector<8x128xf32>
    %458 = vector.extract_strided_slice %452 {offsets = [0, 0], sizes = [4, 128], strides = [1, 1]} : vector<8x128xf32> to vector<4x128xf32>
    %c0_48 = arith.constant 0 : index
    %c0_49 = arith.constant 0 : index
    %459 = arith.index_cast %98 : i32 to index
    %460 = vector.load %arg7[%c0_48, %c0_49, %459] : memref<2x4x256xf32, #tpu.memory_space<vmem>>, vector<1x4x128xf32>
    %461 = vector.shape_cast %460 : vector<1x4x128xf32> to vector<4x128xf32>
    %462 = vector.shape_cast %458 : vector<4x128xf32> to vector<1x4x128xf32>
    tpu.vector_store %arg7[%c0_48, %c0_49, %459], %462 {strides = array<i32>} : memref<2x4x256xf32, #tpu.memory_space<vmem>>, vector<1x4x128xf32>,
    %463 = vector.extract_strided_slice %457 {offsets = [0, 0], sizes = [4, 128], strides = [1, 1]} : vector<8x128xf32> to vector<4x128xf32>
    %c0_50 = arith.constant 0 : index
    %c0_51 = arith.constant 0 : index
    %464 = arith.index_cast %98 : i32 to index
    %465 = vector.load %arg8[%c0_50, %c0_51, %464] : memref<2x4x256xf32, #tpu.memory_space<vmem>>, vector<1x4x128xf32>
    %466 = vector.shape_cast %465 : vector<1x4x128xf32> to vector<4x128xf32>
    %467 = vector.shape_cast %463 : vector<4x128xf32> to vector<1x4x128xf32>
    tpu.vector_store %arg8[%c0_50, %c0_51, %464], %467 {strides = array<i32>} : memref<2x4x256xf32, #tpu.memory_space<vmem>>, vector<1x4x128xf32>,
    %cst_52 = arith.constant dense<0.000000e+00> : vector<128xf32>
    %468 = vector.multi_reduction <add>, %457, %cst_52 [0] : vector<8x128xf32> to vector<128xf32>
    %469 = vector.shape_cast %468 : vector<128xf32> to vector<1x128xf32>
    %470 = vector.broadcast %85 : vector<8x1xf32> to vector<8x128xf32>
    %471 = arith.mulf %470, %388 : vector<8x128xf32>
    %472 = vector.broadcast %86 : vector<8x1xf32> to vector<8x128xf32>
    %473 = arith.mulf %472, %393 : vector<8x128xf32>
    %474 = arith.addf %471, %473 : vector<8x128xf32>
    %475 = vector.broadcast %87 : vector<8x1xf32> to vector<8x128xf32>
    %476 = arith.mulf %475, %398 : vector<8x128xf32>
    %477 = arith.addf %474, %476 : vector<8x128xf32>
    %478 = vector.broadcast %88 : vector<8x1xf32> to vector<8x128xf32>
    %479 = arith.mulf %478, %403 : vector<8x128xf32>
    %480 = arith.addf %477, %479 : vector<8x128xf32>
    %481 = vector.broadcast %89 : vector<8x1xf32> to vector<8x128xf32>
    %482 = arith.mulf %481, %408 : vector<8x128xf32>
    %483 = arith.addf %480, %482 : vector<8x128xf32>
    %484 = vector.broadcast %90 : vector<8x1xf32> to vector<8x128xf32>
    %485 = arith.mulf %484, %413 : vector<8x128xf32>
    %486 = arith.addf %483, %485 : vector<8x128xf32>
    %487 = vector.broadcast %91 : vector<8x1xf32> to vector<8x128xf32>
    %488 = arith.mulf %487, %418 : vector<8x128xf32>
    %489 = arith.addf %486, %488 : vector<8x128xf32>
    %490 = vector.broadcast %92 : vector<8x1xf32> to vector<8x128xf32>
    %491 = arith.mulf %490, %423 : vector<8x128xf32>
    %492 = arith.addf %489, %491 : vector<8x128xf32>
    %493 = vector.broadcast %94 : vector<8x1xf32> to vector<8x128xf32>
    %494 = arith.mulf %493, %429 : vector<8x128xf32>
    %495 = vector.broadcast %96 : vector<8x1xf32> to vector<8x128xf32>
    %496 = arith.mulf %495, %492 : vector<8x128xf32>
    %497 = arith.addf %494, %496 : vector<8x128xf32>
    %498 = vector.extract_strided_slice %492 {offsets = [0, 0], sizes = [4, 128], strides = [1, 1]} : vector<8x128xf32> to vector<4x128xf32>
    %c1 = arith.constant 1 : index
    %c0_53 = arith.constant 0 : index
    %499 = arith.index_cast %98 : i32 to index
    %500 = vector.load %arg7[%c1, %c0_53, %499] : memref<2x4x256xf32, #tpu.memory_space<vmem>>, vector<1x4x128xf32>
    %501 = vector.shape_cast %500 : vector<1x4x128xf32> to vector<4x128xf32>
    %502 = vector.shape_cast %498 : vector<4x128xf32> to vector<1x4x128xf32>
    tpu.vector_store %arg7[%c1, %c0_53, %499], %502 {strides = array<i32>} : memref<2x4x256xf32, #tpu.memory_space<vmem>>, vector<1x4x128xf32>,
    %503 = vector.extract_strided_slice %497 {offsets = [0, 0], sizes = [4, 128], strides = [1, 1]} : vector<8x128xf32> to vector<4x128xf32>
    %c1_54 = arith.constant 1 : index
    %c0_55 = arith.constant 0 : index
    %504 = arith.index_cast %98 : i32 to index
    %505 = vector.load %arg8[%c1_54, %c0_55, %504] : memref<2x4x256xf32, #tpu.memory_space<vmem>>, vector<1x4x128xf32>
    %506 = vector.shape_cast %505 : vector<1x4x128xf32> to vector<4x128xf32>
    %507 = vector.shape_cast %503 : vector<4x128xf32> to vector<1x4x128xf32>
    tpu.vector_store %arg8[%c1_54, %c0_55, %504], %507 {strides = array<i32>} : memref<2x4x256xf32, #tpu.memory_space<vmem>>, vector<1x4x128xf32>,
    %cst_56 = arith.constant dense<0.000000e+00> : vector<128xf32>
    %508 = vector.multi_reduction <add>, %497, %cst_56 [0] : vector<8x128xf32> to vector<128xf32>
    %509 = vector.shape_cast %508 : vector<128xf32> to vector<1x128xf32>
    %510 = tpu.concatenate %469, %509 in 0 : vector<1x128xf32>, vector<1x128xf32> -> vector<2x128xf32>
    %c0_57 = arith.constant 0 : index
    %511 = arith.index_cast %98 : i32 to index
    %512 = vector.load %arg9[%c0_57, %511] : memref<2x256xf32, #tpu.memory_space<vmem>>, vector<2x128xf32>
    tpu.vector_store %arg9[%c0_57, %511], %510 {strides = array<i32>} : memref<2x256xf32, #tpu.memory_space<vmem>>, vector<2x128xf32>,
    %c1_i32 = arith.constant 1 : i32
    %c128_i32_58 = arith.constant 128 : i32
    %513 = arith.muli %c1_i32, %c128_i32_58 : i32
    %514 = tpu.assume_multiple %513, 128 : i32
    %c0_59 = arith.constant 0 : index
    %515 = arith.index_cast %514 : i32 to index
    %516 = vector.load %arg1[%c0_59, %515] : memref<8x256xf32, #tpu.memory_space<vmem>>, vector<8x128xf32>
    %517 = vector.broadcast %5 : vector<8x1xf32> to vector<8x128xf32>
    %518 = arith.cmpf oge, %516, %517 : vector<8x128xf32>
    %519 = vector.broadcast %6 : vector<8x1xf32> to vector<8x128xf32>
    %520 = arith.cmpf oge, %516, %519 : vector<8x128xf32>
    %521 = vector.broadcast %7 : vector<8x1xf32> to vector<8x128xf32>
    %522 = arith.cmpf oge, %516, %521 : vector<8x128xf32>
    %523 = vector.broadcast %8 : vector<8x1xf32> to vector<8x128xf32>
    %524 = arith.cmpf oge, %516, %523 : vector<8x128xf32>
    %525 = vector.broadcast %9 : vector<8x1xf32> to vector<8x128xf32>
    %526 = arith.cmpf oge, %516, %525 : vector<8x128xf32>
    %527 = vector.broadcast %10 : vector<8x1xf32> to vector<8x128xf32>
    %528 = arith.cmpf oge, %516, %527 : vector<8x128xf32>
    %529 = vector.broadcast %11 : vector<8x1xf32> to vector<8x128xf32>
    %530 = arith.cmpf oge, %516, %529 : vector<8x128xf32>
    %531 = vector.broadcast %12 : vector<8x1xf32> to vector<8x128xf32>
    %532 = arith.cmpf oge, %516, %531 : vector<8x128xf32>
    %533 = vector.broadcast %13 : vector<8x1xf32> to vector<8x128xf32>
    %534 = arith.cmpf oge, %516, %533 : vector<8x128xf32>
    %535 = vector.broadcast %14 : vector<8x1xf32> to vector<8x128xf32>
    %536 = arith.cmpf oge, %516, %535 : vector<8x128xf32>
    %537 = vector.broadcast %15 : vector<8x1xf32> to vector<8x128xf32>
    %538 = arith.cmpf oge, %516, %537 : vector<8x128xf32>
    %539 = vector.broadcast %16 : vector<8x1xf32> to vector<8x128xf32>
    %540 = arith.cmpf oge, %516, %539 : vector<8x128xf32>
    %cst_60 = arith.constant dense<true> : vector<8x128xi1>
    %541 = arith.xori %520, %cst_60 : vector<8x128xi1>
    %542 = arith.andi %518, %541 : vector<8x128xi1>
    %543 = arith.extui %542 : vector<8x128xi1> to vector<8x128xi32>
    %544 = arith.sitofp %543 : vector<8x128xi32> to vector<8x128xf32>
    %cst_61 = arith.constant dense<true> : vector<8x128xi1>
    %545 = arith.xori %522, %cst_61 : vector<8x128xi1>
    %546 = arith.andi %520, %545 : vector<8x128xi1>
    %547 = arith.extui %546 : vector<8x128xi1> to vector<8x128xi32>
    %548 = arith.sitofp %547 : vector<8x128xi32> to vector<8x128xf32>
    %cst_62 = arith.constant dense<true> : vector<8x128xi1>
    %549 = arith.xori %524, %cst_62 : vector<8x128xi1>
    %550 = arith.andi %522, %549 : vector<8x128xi1>
    %551 = arith.extui %550 : vector<8x128xi1> to vector<8x128xi32>
    %552 = arith.sitofp %551 : vector<8x128xi32> to vector<8x128xf32>
    %cst_63 = arith.constant dense<true> : vector<8x128xi1>
    %553 = arith.xori %526, %cst_63 : vector<8x128xi1>
    %554 = arith.andi %524, %553 : vector<8x128xi1>
    %555 = arith.extui %554 : vector<8x128xi1> to vector<8x128xi32>
    %556 = arith.sitofp %555 : vector<8x128xi32> to vector<8x128xf32>
    %cst_64 = arith.constant dense<true> : vector<8x128xi1>
    %557 = arith.xori %528, %cst_64 : vector<8x128xi1>
    %558 = arith.andi %526, %557 : vector<8x128xi1>
    %559 = arith.extui %558 : vector<8x128xi1> to vector<8x128xi32>
    %560 = arith.sitofp %559 : vector<8x128xi32> to vector<8x128xf32>
    %cst_65 = arith.constant dense<true> : vector<8x128xi1>
    %561 = arith.xori %530, %cst_65 : vector<8x128xi1>
    %562 = arith.andi %528, %561 : vector<8x128xi1>
    %563 = arith.extui %562 : vector<8x128xi1> to vector<8x128xi32>
    %564 = arith.sitofp %563 : vector<8x128xi32> to vector<8x128xf32>
    %cst_66 = arith.constant dense<true> : vector<8x128xi1>
    %565 = arith.xori %532, %cst_66 : vector<8x128xi1>
    %566 = arith.andi %530, %565 : vector<8x128xi1>
    %567 = arith.extui %566 : vector<8x128xi1> to vector<8x128xi32>
    %568 = arith.sitofp %567 : vector<8x128xi32> to vector<8x128xf32>
    %cst_67 = arith.constant dense<true> : vector<8x128xi1>
    %569 = arith.xori %534, %cst_67 : vector<8x128xi1>
    %570 = arith.andi %532, %569 : vector<8x128xi1>
    %571 = arith.extui %570 : vector<8x128xi1> to vector<8x128xi32>
    %572 = arith.sitofp %571 : vector<8x128xi32> to vector<8x128xf32>
    %cst_68 = arith.constant dense<true> : vector<8x128xi1>
    %573 = arith.xori %536, %cst_68 : vector<8x128xi1>
    %574 = arith.andi %534, %573 : vector<8x128xi1>
    %575 = arith.extui %574 : vector<8x128xi1> to vector<8x128xi32>
    %576 = arith.sitofp %575 : vector<8x128xi32> to vector<8x128xf32>
    %cst_69 = arith.constant dense<true> : vector<8x128xi1>
    %577 = arith.xori %538, %cst_69 : vector<8x128xi1>
    %578 = arith.andi %536, %577 : vector<8x128xi1>
    %579 = arith.extui %578 : vector<8x128xi1> to vector<8x128xi32>
    %580 = arith.sitofp %579 : vector<8x128xi32> to vector<8x128xf32>
    %cst_70 = arith.constant dense<true> : vector<8x128xi1>
    %581 = arith.xori %540, %cst_70 : vector<8x128xi1>
    %582 = arith.andi %538, %581 : vector<8x128xi1>
    %583 = arith.extui %582 : vector<8x128xi1> to vector<8x128xi32>
    %584 = arith.sitofp %583 : vector<8x128xi32> to vector<8x128xf32>
    %585 = vector.broadcast %17 : vector<8x1xf32> to vector<8x128xf32>
    %586 = arith.mulf %516, %585 : vector<8x128xf32>
    %587 = vector.broadcast %47 : vector<8x1xf32> to vector<8x128xf32>
    %588 = arith.addf %586, %587 : vector<8x128xf32>
    %589 = vector.broadcast %18 : vector<8x1xf32> to vector<8x128xf32>
    %590 = arith.mulf %516, %589 : vector<8x128xf32>
    %591 = vector.broadcast %48 : vector<8x1xf32> to vector<8x128xf32>
    %592 = arith.addf %590, %591 : vector<8x128xf32>
    %593 = vector.broadcast %19 : vector<8x1xf32> to vector<8x128xf32>
    %594 = arith.mulf %516, %593 : vector<8x128xf32>
    %595 = vector.broadcast %49 : vector<8x1xf32> to vector<8x128xf32>
    %596 = arith.addf %594, %595 : vector<8x128xf32>
    %597 = vector.broadcast %20 : vector<8x1xf32> to vector<8x128xf32>
    %598 = arith.mulf %516, %597 : vector<8x128xf32>
    %599 = vector.broadcast %50 : vector<8x1xf32> to vector<8x128xf32>
    %600 = arith.addf %598, %599 : vector<8x128xf32>
    %601 = vector.broadcast %21 : vector<8x1xf32> to vector<8x128xf32>
    %602 = arith.mulf %516, %601 : vector<8x128xf32>
    %603 = vector.broadcast %51 : vector<8x1xf32> to vector<8x128xf32>
    %604 = arith.addf %602, %603 : vector<8x128xf32>
    %605 = vector.broadcast %22 : vector<8x1xf32> to vector<8x128xf32>
    %606 = arith.mulf %516, %605 : vector<8x128xf32>
    %607 = vector.broadcast %52 : vector<8x1xf32> to vector<8x128xf32>
    %608 = arith.addf %606, %607 : vector<8x128xf32>
    %609 = vector.broadcast %23 : vector<8x1xf32> to vector<8x128xf32>
    %610 = arith.mulf %516, %609 : vector<8x128xf32>
    %611 = vector.broadcast %53 : vector<8x1xf32> to vector<8x128xf32>
    %612 = arith.addf %610, %611 : vector<8x128xf32>
    %613 = vector.broadcast %24 : vector<8x1xf32> to vector<8x128xf32>
    %614 = arith.mulf %516, %613 : vector<8x128xf32>
    %615 = vector.broadcast %54 : vector<8x1xf32> to vector<8x128xf32>
    %616 = arith.addf %614, %615 : vector<8x128xf32>
    %617 = vector.broadcast %25 : vector<8x1xf32> to vector<8x128xf32>
    %618 = arith.mulf %516, %617 : vector<8x128xf32>
    %619 = vector.broadcast %55 : vector<8x1xf32> to vector<8x128xf32>
    %620 = arith.addf %618, %619 : vector<8x128xf32>
    %621 = vector.broadcast %26 : vector<8x1xf32> to vector<8x128xf32>
    %622 = arith.mulf %516, %621 : vector<8x128xf32>
    %623 = vector.broadcast %56 : vector<8x1xf32> to vector<8x128xf32>
    %624 = arith.addf %622, %623 : vector<8x128xf32>
    %625 = vector.broadcast %27 : vector<8x1xf32> to vector<8x128xf32>
    %626 = arith.mulf %516, %625 : vector<8x128xf32>
    %627 = vector.broadcast %57 : vector<8x1xf32> to vector<8x128xf32>
    %628 = arith.addf %626, %627 : vector<8x128xf32>
    %629 = arith.mulf %588, %544 : vector<8x128xf32>
    %cst_71 = arith.constant 1.000000e+00 : f32
    %630 = vector.broadcast %cst_71 : f32 to vector<8x128xf32>
    %631 = arith.subf %630, %592 : vector<8x128xf32>
    %632 = arith.mulf %631, %548 : vector<8x128xf32>
    %633 = arith.addf %629, %632 : vector<8x128xf32>
    %634 = arith.mulf %592, %548 : vector<8x128xf32>
    %cst_72 = arith.constant 1.000000e+00 : f32
    %635 = vector.broadcast %cst_72 : f32 to vector<8x128xf32>
    %636 = arith.subf %635, %596 : vector<8x128xf32>
    %637 = arith.mulf %636, %552 : vector<8x128xf32>
    %638 = arith.addf %634, %637 : vector<8x128xf32>
    %639 = arith.mulf %596, %552 : vector<8x128xf32>
    %cst_73 = arith.constant 1.000000e+00 : f32
    %640 = vector.broadcast %cst_73 : f32 to vector<8x128xf32>
    %641 = arith.subf %640, %600 : vector<8x128xf32>
    %642 = arith.mulf %641, %556 : vector<8x128xf32>
    %643 = arith.addf %639, %642 : vector<8x128xf32>
    %644 = arith.mulf %600, %556 : vector<8x128xf32>
    %cst_74 = arith.constant 1.000000e+00 : f32
    %645 = vector.broadcast %cst_74 : f32 to vector<8x128xf32>
    %646 = arith.subf %645, %604 : vector<8x128xf32>
    %647 = arith.mulf %646, %560 : vector<8x128xf32>
    %648 = arith.addf %644, %647 : vector<8x128xf32>
    %649 = arith.mulf %604, %560 : vector<8x128xf32>
    %cst_75 = arith.constant 1.000000e+00 : f32
    %650 = vector.broadcast %cst_75 : f32 to vector<8x128xf32>
    %651 = arith.subf %650, %608 : vector<8x128xf32>
    %652 = arith.mulf %651, %564 : vector<8x128xf32>
    %653 = arith.addf %649, %652 : vector<8x128xf32>
    %654 = arith.mulf %608, %564 : vector<8x128xf32>
    %cst_76 = arith.constant 1.000000e+00 : f32
    %655 = vector.broadcast %cst_76 : f32 to vector<8x128xf32>
    %656 = arith.subf %655, %612 : vector<8x128xf32>
    %657 = arith.mulf %656, %568 : vector<8x128xf32>
    %658 = arith.addf %654, %657 : vector<8x128xf32>
    %659 = arith.mulf %612, %568 : vector<8x128xf32>
    %cst_77 = arith.constant 1.000000e+00 : f32
    %660 = vector.broadcast %cst_77 : f32 to vector<8x128xf32>
    %661 = arith.subf %660, %616 : vector<8x128xf32>
    %662 = arith.mulf %661, %572 : vector<8x128xf32>
    %663 = arith.addf %659, %662 : vector<8x128xf32>
    %664 = arith.mulf %616, %572 : vector<8x128xf32>
    %cst_78 = arith.constant 1.000000e+00 : f32
    %665 = vector.broadcast %cst_78 : f32 to vector<8x128xf32>
    %666 = arith.subf %665, %620 : vector<8x128xf32>
    %667 = arith.mulf %666, %576 : vector<8x128xf32>
    %668 = arith.addf %664, %667 : vector<8x128xf32>
    %669 = arith.mulf %620, %576 : vector<8x128xf32>
    %cst_79 = arith.constant 1.000000e+00 : f32
    %670 = vector.broadcast %cst_79 : f32 to vector<8x128xf32>
    %671 = arith.subf %670, %624 : vector<8x128xf32>
    %672 = arith.mulf %671, %580 : vector<8x128xf32>
    %673 = arith.addf %669, %672 : vector<8x128xf32>
    %674 = arith.mulf %624, %580 : vector<8x128xf32>
    %cst_80 = arith.constant 1.000000e+00 : f32
    %675 = vector.broadcast %cst_80 : f32 to vector<8x128xf32>
    %676 = arith.subf %675, %628 : vector<8x128xf32>
    %677 = arith.mulf %676, %584 : vector<8x128xf32>
    %678 = arith.addf %674, %677 : vector<8x128xf32>
    %679 = vector.broadcast %28 : vector<8x1xf32> to vector<8x128xf32>
    %680 = arith.mulf %516, %679 : vector<8x128xf32>
    %681 = vector.broadcast %58 : vector<8x1xf32> to vector<8x128xf32>
    %682 = arith.addf %680, %681 : vector<8x128xf32>
    %683 = vector.broadcast %29 : vector<8x1xf32> to vector<8x128xf32>
    %684 = arith.mulf %516, %683 : vector<8x128xf32>
    %685 = vector.broadcast %59 : vector<8x1xf32> to vector<8x128xf32>
    %686 = arith.addf %684, %685 : vector<8x128xf32>
    %687 = vector.broadcast %30 : vector<8x1xf32> to vector<8x128xf32>
    %688 = arith.mulf %516, %687 : vector<8x128xf32>
    %689 = vector.broadcast %60 : vector<8x1xf32> to vector<8x128xf32>
    %690 = arith.addf %688, %689 : vector<8x128xf32>
    %691 = vector.broadcast %31 : vector<8x1xf32> to vector<8x128xf32>
    %692 = arith.mulf %516, %691 : vector<8x128xf32>
    %693 = vector.broadcast %61 : vector<8x1xf32> to vector<8x128xf32>
    %694 = arith.addf %692, %693 : vector<8x128xf32>
    %695 = vector.broadcast %32 : vector<8x1xf32> to vector<8x128xf32>
    %696 = arith.mulf %516, %695 : vector<8x128xf32>
    %697 = vector.broadcast %62 : vector<8x1xf32> to vector<8x128xf32>
    %698 = arith.addf %696, %697 : vector<8x128xf32>
    %699 = vector.broadcast %33 : vector<8x1xf32> to vector<8x128xf32>
    %700 = arith.mulf %516, %699 : vector<8x128xf32>
    %701 = vector.broadcast %63 : vector<8x1xf32> to vector<8x128xf32>
    %702 = arith.addf %700, %701 : vector<8x128xf32>
    %703 = vector.broadcast %34 : vector<8x1xf32> to vector<8x128xf32>
    %704 = arith.mulf %516, %703 : vector<8x128xf32>
    %705 = vector.broadcast %64 : vector<8x1xf32> to vector<8x128xf32>
    %706 = arith.addf %704, %705 : vector<8x128xf32>
    %707 = vector.broadcast %35 : vector<8x1xf32> to vector<8x128xf32>
    %708 = arith.mulf %516, %707 : vector<8x128xf32>
    %709 = vector.broadcast %65 : vector<8x1xf32> to vector<8x128xf32>
    %710 = arith.addf %708, %709 : vector<8x128xf32>
    %711 = vector.broadcast %36 : vector<8x1xf32> to vector<8x128xf32>
    %712 = arith.mulf %516, %711 : vector<8x128xf32>
    %713 = vector.broadcast %66 : vector<8x1xf32> to vector<8x128xf32>
    %714 = arith.addf %712, %713 : vector<8x128xf32>
    %715 = vector.broadcast %37 : vector<8x1xf32> to vector<8x128xf32>
    %716 = arith.mulf %516, %715 : vector<8x128xf32>
    %717 = vector.broadcast %67 : vector<8x1xf32> to vector<8x128xf32>
    %718 = arith.addf %716, %717 : vector<8x128xf32>
    %719 = arith.mulf %682, %633 : vector<8x128xf32>
    %cst_81 = arith.constant 1.000000e+00 : f32
    %720 = vector.broadcast %cst_81 : f32 to vector<8x128xf32>
    %721 = arith.subf %720, %686 : vector<8x128xf32>
    %722 = arith.mulf %721, %638 : vector<8x128xf32>
    %723 = arith.addf %719, %722 : vector<8x128xf32>
    %724 = arith.mulf %686, %638 : vector<8x128xf32>
    %cst_82 = arith.constant 1.000000e+00 : f32
    %725 = vector.broadcast %cst_82 : f32 to vector<8x128xf32>
    %726 = arith.subf %725, %690 : vector<8x128xf32>
    %727 = arith.mulf %726, %643 : vector<8x128xf32>
    %728 = arith.addf %724, %727 : vector<8x128xf32>
    %729 = arith.mulf %690, %643 : vector<8x128xf32>
    %cst_83 = arith.constant 1.000000e+00 : f32
    %730 = vector.broadcast %cst_83 : f32 to vector<8x128xf32>
    %731 = arith.subf %730, %694 : vector<8x128xf32>
    %732 = arith.mulf %731, %648 : vector<8x128xf32>
    %733 = arith.addf %729, %732 : vector<8x128xf32>
    %734 = arith.mulf %694, %648 : vector<8x128xf32>
    %cst_84 = arith.constant 1.000000e+00 : f32
    %735 = vector.broadcast %cst_84 : f32 to vector<8x128xf32>
    %736 = arith.subf %735, %698 : vector<8x128xf32>
    %737 = arith.mulf %736, %653 : vector<8x128xf32>
    %738 = arith.addf %734, %737 : vector<8x128xf32>
    %739 = arith.mulf %698, %653 : vector<8x128xf32>
    %cst_85 = arith.constant 1.000000e+00 : f32
    %740 = vector.broadcast %cst_85 : f32 to vector<8x128xf32>
    %741 = arith.subf %740, %702 : vector<8x128xf32>
    %742 = arith.mulf %741, %658 : vector<8x128xf32>
    %743 = arith.addf %739, %742 : vector<8x128xf32>
    %744 = arith.mulf %702, %658 : vector<8x128xf32>
    %cst_86 = arith.constant 1.000000e+00 : f32
    %745 = vector.broadcast %cst_86 : f32 to vector<8x128xf32>
    %746 = arith.subf %745, %706 : vector<8x128xf32>
    %747 = arith.mulf %746, %663 : vector<8x128xf32>
    %748 = arith.addf %744, %747 : vector<8x128xf32>
    %749 = arith.mulf %706, %663 : vector<8x128xf32>
    %cst_87 = arith.constant 1.000000e+00 : f32
    %750 = vector.broadcast %cst_87 : f32 to vector<8x128xf32>
    %751 = arith.subf %750, %710 : vector<8x128xf32>
    %752 = arith.mulf %751, %668 : vector<8x128xf32>
    %753 = arith.addf %749, %752 : vector<8x128xf32>
    %754 = arith.mulf %710, %668 : vector<8x128xf32>
    %cst_88 = arith.constant 1.000000e+00 : f32
    %755 = vector.broadcast %cst_88 : f32 to vector<8x128xf32>
    %756 = arith.subf %755, %714 : vector<8x128xf32>
    %757 = arith.mulf %756, %673 : vector<8x128xf32>
    %758 = arith.addf %754, %757 : vector<8x128xf32>
    %759 = arith.mulf %714, %673 : vector<8x128xf32>
    %cst_89 = arith.constant 1.000000e+00 : f32
    %760 = vector.broadcast %cst_89 : f32 to vector<8x128xf32>
    %761 = arith.subf %760, %718 : vector<8x128xf32>
    %762 = arith.mulf %761, %678 : vector<8x128xf32>
    %763 = arith.addf %759, %762 : vector<8x128xf32>
    %764 = vector.broadcast %38 : vector<8x1xf32> to vector<8x128xf32>
    %765 = arith.mulf %516, %764 : vector<8x128xf32>
    %766 = vector.broadcast %68 : vector<8x1xf32> to vector<8x128xf32>
    %767 = arith.addf %765, %766 : vector<8x128xf32>
    %768 = vector.broadcast %39 : vector<8x1xf32> to vector<8x128xf32>
    %769 = arith.mulf %516, %768 : vector<8x128xf32>
    %770 = vector.broadcast %69 : vector<8x1xf32> to vector<8x128xf32>
    %771 = arith.addf %769, %770 : vector<8x128xf32>
    %772 = vector.broadcast %40 : vector<8x1xf32> to vector<8x128xf32>
    %773 = arith.mulf %516, %772 : vector<8x128xf32>
    %774 = vector.broadcast %70 : vector<8x1xf32> to vector<8x128xf32>
    %775 = arith.addf %773, %774 : vector<8x128xf32>
    %776 = vector.broadcast %41 : vector<8x1xf32> to vector<8x128xf32>
    %777 = arith.mulf %516, %776 : vector<8x128xf32>
    %778 = vector.broadcast %71 : vector<8x1xf32> to vector<8x128xf32>
    %779 = arith.addf %777, %778 : vector<8x128xf32>
    %780 = vector.broadcast %42 : vector<8x1xf32> to vector<8x128xf32>
    %781 = arith.mulf %516, %780 : vector<8x128xf32>
    %782 = vector.broadcast %72 : vector<8x1xf32> to vector<8x128xf32>
    %783 = arith.addf %781, %782 : vector<8x128xf32>
    %784 = vector.broadcast %43 : vector<8x1xf32> to vector<8x128xf32>
    %785 = arith.mulf %516, %784 : vector<8x128xf32>
    %786 = vector.broadcast %73 : vector<8x1xf32> to vector<8x128xf32>
    %787 = arith.addf %785, %786 : vector<8x128xf32>
    %788 = vector.broadcast %44 : vector<8x1xf32> to vector<8x128xf32>
    %789 = arith.mulf %516, %788 : vector<8x128xf32>
    %790 = vector.broadcast %74 : vector<8x1xf32> to vector<8x128xf32>
    %791 = arith.addf %789, %790 : vector<8x128xf32>
    %792 = vector.broadcast %45 : vector<8x1xf32> to vector<8x128xf32>
    %793 = arith.mulf %516, %792 : vector<8x128xf32>
    %794 = vector.broadcast %75 : vector<8x1xf32> to vector<8x128xf32>
    %795 = arith.addf %793, %794 : vector<8x128xf32>
    %796 = vector.broadcast %46 : vector<8x1xf32> to vector<8x128xf32>
    %797 = arith.mulf %516, %796 : vector<8x128xf32>
    %798 = vector.broadcast %76 : vector<8x1xf32> to vector<8x128xf32>
    %799 = arith.addf %797, %798 : vector<8x128xf32>
    %800 = arith.mulf %767, %723 : vector<8x128xf32>
    %cst_90 = arith.constant 1.000000e+00 : f32
    %801 = vector.broadcast %cst_90 : f32 to vector<8x128xf32>
    %802 = arith.subf %801, %771 : vector<8x128xf32>
    %803 = arith.mulf %802, %728 : vector<8x128xf32>
    %804 = arith.addf %800, %803 : vector<8x128xf32>
    %805 = arith.mulf %771, %728 : vector<8x128xf32>
    %cst_91 = arith.constant 1.000000e+00 : f32
    %806 = vector.broadcast %cst_91 : f32 to vector<8x128xf32>
    %807 = arith.subf %806, %775 : vector<8x128xf32>
    %808 = arith.mulf %807, %733 : vector<8x128xf32>
    %809 = arith.addf %805, %808 : vector<8x128xf32>
    %810 = arith.mulf %775, %733 : vector<8x128xf32>
    %cst_92 = arith.constant 1.000000e+00 : f32
    %811 = vector.broadcast %cst_92 : f32 to vector<8x128xf32>
    %812 = arith.subf %811, %779 : vector<8x128xf32>
    %813 = arith.mulf %812, %738 : vector<8x128xf32>
    %814 = arith.addf %810, %813 : vector<8x128xf32>
    %815 = arith.mulf %779, %738 : vector<8x128xf32>
    %cst_93 = arith.constant 1.000000e+00 : f32
    %816 = vector.broadcast %cst_93 : f32 to vector<8x128xf32>
    %817 = arith.subf %816, %783 : vector<8x128xf32>
    %818 = arith.mulf %817, %743 : vector<8x128xf32>
    %819 = arith.addf %815, %818 : vector<8x128xf32>
    %820 = arith.mulf %783, %743 : vector<8x128xf32>
    %cst_94 = arith.constant 1.000000e+00 : f32
    %821 = vector.broadcast %cst_94 : f32 to vector<8x128xf32>
    %822 = arith.subf %821, %787 : vector<8x128xf32>
    %823 = arith.mulf %822, %748 : vector<8x128xf32>
    %824 = arith.addf %820, %823 : vector<8x128xf32>
    %825 = arith.mulf %787, %748 : vector<8x128xf32>
    %cst_95 = arith.constant 1.000000e+00 : f32
    %826 = vector.broadcast %cst_95 : f32 to vector<8x128xf32>
    %827 = arith.subf %826, %791 : vector<8x128xf32>
    %828 = arith.mulf %827, %753 : vector<8x128xf32>
    %829 = arith.addf %825, %828 : vector<8x128xf32>
    %830 = arith.mulf %791, %753 : vector<8x128xf32>
    %cst_96 = arith.constant 1.000000e+00 : f32
    %831 = vector.broadcast %cst_96 : f32 to vector<8x128xf32>
    %832 = arith.subf %831, %795 : vector<8x128xf32>
    %833 = arith.mulf %832, %758 : vector<8x128xf32>
    %834 = arith.addf %830, %833 : vector<8x128xf32>
    %835 = arith.mulf %795, %758 : vector<8x128xf32>
    %cst_97 = arith.constant 1.000000e+00 : f32
    %836 = vector.broadcast %cst_97 : f32 to vector<8x128xf32>
    %837 = arith.subf %836, %799 : vector<8x128xf32>
    %838 = arith.mulf %837, %763 : vector<8x128xf32>
    %839 = arith.addf %835, %838 : vector<8x128xf32>
    %840 = arith.negf %516 : vector<8x128xf32>
    %841 = math.exp %840 : vector<8x128xf32>
    %cst_98 = arith.constant 1.000000e+00 : f32
    %842 = vector.broadcast %cst_98 : f32 to vector<8x128xf32>
    %843 = arith.addf %842, %841 : vector<8x128xf32>
    %844 = arith.divf %842, %843 : vector<8x128xf32>
    %845 = arith.mulf %516, %844 : vector<8x128xf32>
    %846 = vector.broadcast %77 : vector<8x1xf32> to vector<8x128xf32>
    %847 = arith.mulf %846, %804 : vector<8x128xf32>
    %848 = vector.broadcast %78 : vector<8x1xf32> to vector<8x128xf32>
    %849 = arith.mulf %848, %809 : vector<8x128xf32>
    %850 = arith.addf %847, %849 : vector<8x128xf32>
    %851 = vector.broadcast %79 : vector<8x1xf32> to vector<8x128xf32>
    %852 = arith.mulf %851, %814 : vector<8x128xf32>
    %853 = arith.addf %850, %852 : vector<8x128xf32>
    %854 = vector.broadcast %80 : vector<8x1xf32> to vector<8x128xf32>
    %855 = arith.mulf %854, %819 : vector<8x128xf32>
    %856 = arith.addf %853, %855 : vector<8x128xf32>
    %857 = vector.broadcast %81 : vector<8x1xf32> to vector<8x128xf32>
    %858 = arith.mulf %857, %824 : vector<8x128xf32>
    %859 = arith.addf %856, %858 : vector<8x128xf32>
    %860 = vector.broadcast %82 : vector<8x1xf32> to vector<8x128xf32>
    %861 = arith.mulf %860, %829 : vector<8x128xf32>
    %862 = arith.addf %859, %861 : vector<8x128xf32>
    %863 = vector.broadcast %83 : vector<8x1xf32> to vector<8x128xf32>
    %864 = arith.mulf %863, %834 : vector<8x128xf32>
    %865 = arith.addf %862, %864 : vector<8x128xf32>
    %866 = vector.broadcast %84 : vector<8x1xf32> to vector<8x128xf32>
    %867 = arith.mulf %866, %839 : vector<8x128xf32>
    %868 = arith.addf %865, %867 : vector<8x128xf32>
    %869 = vector.broadcast %93 : vector<8x1xf32> to vector<8x128xf32>
    %870 = arith.mulf %869, %845 : vector<8x128xf32>
    %871 = vector.broadcast %95 : vector<8x1xf32> to vector<8x128xf32>
    %872 = arith.mulf %871, %868 : vector<8x128xf32>
    %873 = arith.addf %870, %872 : vector<8x128xf32>
    %874 = vector.extract_strided_slice %868 {offsets = [0, 0], sizes = [4, 128], strides = [1, 1]} : vector<8x128xf32> to vector<4x128xf32>
    %c0_99 = arith.constant 0 : index
    %c0_100 = arith.constant 0 : index
    %875 = arith.index_cast %514 : i32 to index
    %876 = vector.load %arg7[%c0_99, %c0_100, %875] : memref<2x4x256xf32, #tpu.memory_space<vmem>>, vector<1x4x128xf32>
    %877 = vector.shape_cast %876 : vector<1x4x128xf32> to vector<4x128xf32>
    %878 = vector.shape_cast %874 : vector<4x128xf32> to vector<1x4x128xf32>
    tpu.vector_store %arg7[%c0_99, %c0_100, %875], %878 {strides = array<i32>} : memref<2x4x256xf32, #tpu.memory_space<vmem>>, vector<1x4x128xf32>,
    %879 = vector.extract_strided_slice %873 {offsets = [0, 0], sizes = [4, 128], strides = [1, 1]} : vector<8x128xf32> to vector<4x128xf32>
    %c0_101 = arith.constant 0 : index
    %c0_102 = arith.constant 0 : index
    %880 = arith.index_cast %514 : i32 to index
    %881 = vector.load %arg8[%c0_101, %c0_102, %880] : memref<2x4x256xf32, #tpu.memory_space<vmem>>, vector<1x4x128xf32>
    %882 = vector.shape_cast %881 : vector<1x4x128xf32> to vector<4x128xf32>
    %883 = vector.shape_cast %879 : vector<4x128xf32> to vector<1x4x128xf32>
    tpu.vector_store %arg8[%c0_101, %c0_102, %880], %883 {strides = array<i32>} : memref<2x4x256xf32, #tpu.memory_space<vmem>>, vector<1x4x128xf32>,
    %cst_103 = arith.constant dense<0.000000e+00> : vector<128xf32>
    %884 = vector.multi_reduction <add>, %873, %cst_103 [0] : vector<8x128xf32> to vector<128xf32>
    %885 = vector.shape_cast %884 : vector<128xf32> to vector<1x128xf32>
    %886 = vector.broadcast %85 : vector<8x1xf32> to vector<8x128xf32>
    %887 = arith.mulf %886, %804 : vector<8x128xf32>
    %888 = vector.broadcast %86 : vector<8x1xf32> to vector<8x128xf32>
    %889 = arith.mulf %888, %809 : vector<8x128xf32>
    %890 = arith.addf %887, %889 : vector<8x128xf32>
    %891 = vector.broadcast %87 : vector<8x1xf32> to vector<8x128xf32>
    %892 = arith.mulf %891, %814 : vector<8x128xf32>
    %893 = arith.addf %890, %892 : vector<8x128xf32>
    %894 = vector.broadcast %88 : vector<8x1xf32> to vector<8x128xf32>
    %895 = arith.mulf %894, %819 : vector<8x128xf32>
    %896 = arith.addf %893, %895 : vector<8x128xf32>
    %897 = vector.broadcast %89 : vector<8x1xf32> to vector<8x128xf32>
    %898 = arith.mulf %897, %824 : vector<8x128xf32>
    %899 = arith.addf %896, %898 : vector<8x128xf32>
    %900 = vector.broadcast %90 : vector<8x1xf32> to vector<8x128xf32>
    %901 = arith.mulf %900, %829 : vector<8x128xf32>
    %902 = arith.addf %899, %901 : vector<8x128xf32>
    %903 = vector.broadcast %91 : vector<8x1xf32> to vector<8x128xf32>
    %904 = arith.mulf %903, %834 : vector<8x128xf32>
    %905 = arith.addf %902, %904 : vector<8x128xf32>
    %906 = vector.broadcast %92 : vector<8x1xf32> to vector<8x128xf32>
    %907 = arith.mulf %906, %839 : vector<8x128xf32>
    %908 = arith.addf %905, %907 : vector<8x128xf32>
    %909 = vector.broadcast %94 : vector<8x1xf32> to vector<8x128xf32>
    %910 = arith.mulf %909, %845 : vector<8x128xf32>
    %911 = vector.broadcast %96 : vector<8x1xf32> to vector<8x128xf32>
    %912 = arith.mulf %911, %908 : vector<8x128xf32>
    %913 = arith.addf %910, %912 : vector<8x128xf32>
    %914 = vector.extract_strided_slice %908 {offsets = [0, 0], sizes = [4, 128], strides = [1, 1]} : vector<8x128xf32> to vector<4x128xf32>
    %c1_104 = arith.constant 1 : index
    %c0_105 = arith.constant 0 : index
    %915 = arith.index_cast %514 : i32 to index
    %916 = vector.load %arg7[%c1_104, %c0_105, %915] : memref<2x4x256xf32, #tpu.memory_space<vmem>>, vector<1x4x128xf32>
    %917 = vector.shape_cast %916 : vector<1x4x128xf32> to vector<4x128xf32>
    %918 = vector.shape_cast %914 : vector<4x128xf32> to vector<1x4x128xf32>
    tpu.vector_store %arg7[%c1_104, %c0_105, %915], %918 {strides = array<i32>} : memref<2x4x256xf32, #tpu.memory_space<vmem>>, vector<1x4x128xf32>,
    %919 = vector.extract_strided_slice %913 {offsets = [0, 0], sizes = [4, 128], strides = [1, 1]} : vector<8x128xf32> to vector<4x128xf32>
    %c1_106 = arith.constant 1 : index
    %c0_107 = arith.constant 0 : index
    %920 = arith.index_cast %514 : i32 to index
    %921 = vector.load %arg8[%c1_106, %c0_107, %920] : memref<2x4x256xf32, #tpu.memory_space<vmem>>, vector<1x4x128xf32>
    %922 = vector.shape_cast %921 : vector<1x4x128xf32> to vector<4x128xf32>
    %923 = vector.shape_cast %919 : vector<4x128xf32> to vector<1x4x128xf32>
    tpu.vector_store %arg8[%c1_106, %c0_107, %920], %923 {strides = array<i32>} : memref<2x4x256xf32, #tpu.memory_space<vmem>>, vector<1x4x128xf32>,
    %cst_108 = arith.constant dense<0.000000e+00> : vector<128xf32>
    %924 = vector.multi_reduction <add>, %913, %cst_108 [0] : vector<8x128xf32> to vector<128xf32>
    %925 = vector.shape_cast %924 : vector<128xf32> to vector<1x128xf32>
    %926 = tpu.concatenate %885, %925 in 0 : vector<1x128xf32>, vector<1x128xf32> -> vector<2x128xf32>
    %c0_109 = arith.constant 0 : index
    %927 = arith.index_cast %514 : i32 to index
    %928 = vector.load %arg9[%c0_109, %927] : memref<2x256xf32, #tpu.memory_space<vmem>>, vector<2x128xf32>
    tpu.vector_store %arg9[%c0_109, %927], %926 {strides = array<i32>} : memref<2x256xf32, #tpu.memory_space<vmem>>, vector<2x128xf32>,
    %c2_i32 = arith.constant 2 : i32
    return
  }
  func.func @transform_0(%arg0: i32) -> (i32, i32) {
    %c0_i32 = arith.constant 0 : i32
    %c0_i32_0 = arith.constant 0 : i32
    return %c0_i32, %arg0 : i32, i32
  }
  func.func @transform_1(%arg0: i32) -> (i32, i32) {
    %c0_i32 = arith.constant 0 : i32
    %c0_i32_0 = arith.constant 0 : i32
    %c0_i32_1 = arith.constant 0 : i32
    return %c0_i32, %c0_i32_0 : i32, i32
  }
  func.func @transform_2(%arg0: i32) -> (i32, i32) {
    %c0_i32 = arith.constant 0 : i32
    %c0_i32_0 = arith.constant 0 : i32
    %c0_i32_1 = arith.constant 0 : i32
    return %c0_i32, %c0_i32_0 : i32, i32
  }
  func.func @transform_3(%arg0: i32) -> (i32, i32) {
    %c0_i32 = arith.constant 0 : i32
    %c0_i32_0 = arith.constant 0 : i32
    %c0_i32_1 = arith.constant 0 : i32
    return %c0_i32, %c0_i32_0 : i32, i32
  }
  func.func @transform_4(%arg0: i32) -> (i32, i32) {
    %c0_i32 = arith.constant 0 : i32
    %c0_i32_0 = arith.constant 0 : i32
    %c0_i32_1 = arith.constant 0 : i32
    return %c0_i32, %c0_i32_0 : i32, i32
  }
  func.func @transform_5(%arg0: i32) -> (i32, i32) {
    %c0_i32 = arith.constant 0 : i32
    %c0_i32_0 = arith.constant 0 : i32
    %c0_i32_1 = arith.constant 0 : i32
    return %c0_i32, %c0_i32_0 : i32, i32
  }
  func.func @transform_6(%arg0: i32) -> (i32, i32, i32) {
    %c0_i32 = arith.constant 0 : i32
    %c0_i32_0 = arith.constant 0 : i32
    %c0_i32_1 = arith.constant 0 : i32
    return %c0_i32, %c0_i32_0, %arg0 : i32, i32, i32
  }
  func.func @transform_7(%arg0: i32) -> (i32, i32, i32) {
    %c0_i32 = arith.constant 0 : i32
    %c0_i32_0 = arith.constant 0 : i32
    %c0_i32_1 = arith.constant 0 : i32
    return %c0_i32, %c0_i32_0, %arg0 : i32, i32, i32
  }
  func.func @transform_8(%arg0: i32) -> (i32, i32) {
    %c0_i32 = arith.constant 0 : i32
    %c0_i32_0 = arith.constant 0 : i32
    return %c0_i32, %arg0 : i32, i32
  }
}

</mosaic_0001>

<llo_original>
// kernel: tpu_custom_call.1
$region0: #{tpu_custom_call.1}
  #allocation0 [shape = 'u32[]', space=smem, size = 0x4, offset = 0x4, fixed_abs, tag = 'smem constant byte address 0x4 - core index']
  #allocation1 [shape = 'u32[144,128]{1,0:T(1,128)}', space=vmem, size = 0x12000, scoped, tag = 'internal scratch']
  %s0 = inlined_call_operand.vmem [shape: f32[8,512], index: 0, kind: input, shape index: {}]
  %s1 = inlined_call_operand.vmem [shape: f32[8,12], index: 1, kind: input, shape index: {}]
  %s2 = inlined_call_operand.vmem [shape: f32[8,30], index: 2, kind: input, shape index: {}]
  %s3 = inlined_call_operand.hbm [shape: f32[8,30], index: 3, kind: input, shape index: {}]
  %s4 = inlined_call_operand.vmem [shape: f32[16,8], index: 4, kind: input, shape index: {}]
  %s5 = inlined_call_operand.vmem [shape: f32[16,2], index: 5, kind: input, shape index: {}]
  %s6 = inlined_call_operand.hbm [shape: f32[2,4,512], index: 6, kind: output, shape index: {0}]
  %s7 = inlined_call_operand.hbm [shape: f32[2,4,512], index: 7, kind: output, shape index: {1}]
  %s8 = inlined_call_operand.hbm [shape: f32[2,512], index: 8, kind: output, shape index: {2}]
  %9 = xla_tuple %s6, %s7, %s8
  %s10 = sld [smem:[#allocation0]]
  $region77: #{tpu_custom_call.1} parent=0
    _
  %s12 = ssub.s32 1, %s10
  %s13 = scalar_select 0, %s12, %s10
  $region1: #{tpu_custom_call.1} parent=0
    #allocation2 [shape = 'u8[4096]{0}', space=vmem, size = 0x1000, scoped, tag = 'input window, operand 3, single buffered']
    #allocation3 [shape = 's32[2]{0}', space=sflag, size = 0x8, scoped, tag = 'scoped memory for tpu_custom_call.1']
    #allocation4 [shape = 's32[2]{0}', space=sflag, size = 0x8, scoped, tag = 'scoped memory for tpu_custom_call.1']
    #allocation5 [shape = 'u8[16384]{0}', space=vmem, size = 0x4000, scoped, tag = 'output window, operand 0']
    #allocation6 [shape = 'u8[16384]{0}', space=vmem, size = 0x4000, scoped, tag = 'output window, operand 1']
    #allocation7 [shape = 's32[2]{0}', space=sflag, size = 0x8, scoped, tag = 'scoped memory for tpu_custom_call.1']
    #allocation8 [shape = 'u8[4096]{0}', space=vmem, size = 0x1000, scoped, tag = 'output window, operand 2']
    %14 = vsyncpa [#allocation3], 0
    %15 = vsyncpa [#allocation4], 0
    %s16 = scalar_lea.sflag [#allocation4], 1
    %17 = vsyncpa %s16, 0
    %18 = vsyncpa [#allocation7], 0
    %s19 = scalar_lea.sflag [#allocation7], 1
    %20 = vsyncpa %s19, 0
    loop: start=0, step=1, limit=4
    $region2: #{tpu_custom_call.1} parent=1 // loop_pre_header
      _
    $region3: #{tpu_custom_call.1} parent=1 // loop_header
      %s22 = sphi 0, %s26
      %p23 = scmp.ge.s32.totalorder %s22, 4
      %s32 = sphi 0, %s34
      %s35 = sphi 0, %s32
      %s36 = sphi 0, %s35
      %s52 = sphi 0, %s36
      %s56 = sphi 0, %s56
      %s58 = sphi 0, %s56
      %s59 = sphi 0, %s58
      %s73 = sphi 0, %s59
      %s77 = sphi 0, %s77
      %s79 = sphi 0, %s77
      %s80 = sphi 0, %s79
      %s94 = sphi 0, %s80
      %s98 = sphi 0, %s98
      %s100 = sphi 0, %s98
      %s101 = sphi 0, %s100
      %s115 = sphi 0, %s101
      %s119 = sphi 0, %s119
      %s121 = sphi 0, %s119
      %s122 = sphi 0, %s121
      %s136 = sphi 0, %s122
      %s140 = sphi 0, %s140
      %s142 = sphi 0, %s140
      %s143 = sphi 0, %s142
      %s157 = sphi 0, %s143
      %s163 = sphi 0, %s165
      %s166 = sphi 0, %s163
      %s167 = sphi 0, %s166
      %s183 = sphi 0, %s167
      %s189 = sphi 0, %s191
      %s192 = sphi 0, %s189
      %s193 = sphi 0, %s192
      %s209 = sphi 0, %s193
      %s215 = sphi 0, %s217
      %s218 = sphi 0, %s215
      %s219 = sphi 0, %s218
      %s235 = sphi 0, %s219
    $region4: #{tpu_custom_call.1} parent=1 // loop_header_branch
      %25 = sbr.rel (%p23) target = $region8
    $region5: #{tpu_custom_call.1} parent=1 // loop_body
      %s27 = ssub.s32 %s22, 1
      %s28 = ssub.s32 %s22, 2
      %s29 = sadd.s32 %s22, 1
      %s30 = ssub.s32 %s22, %s29
      %p31 = scmp.eq.s32.totalorder %s30, 0
      %s33 = sadd.s32 %s32, 1
      %s34 = scalar_select %p31, %s32, %s33
      %p37 = pneg %p31
      %p38 = scmp.eq.s32.totalorder %s22, 1
      %p39 = por %p37, %p38
      %p40 = scmp.ne.s32.totalorder %s32, %s35
      %p41 = scmp.eq.s32.totalorder %s22, 0
      %p42 = por %p40, %p41
      %p43 = scmp.ne.s32.totalorder %s32, %s35
      %p44 = scmp.eq.s32.totalorder %s27, 1
      %p45 = por %p43, %p44
      %p46 = scmp.ne.s32.totalorder %s35, %s36
      %p47 = scmp.eq.s32.totalorder %s27, 0
      %p48 = por %p46, %p47
      %p49 = scmp.ne.s32.totalorder %s35, %s36
      %p50 = scmp.eq.s32.totalorder %s28, 1
      %p51 = por %p49, %p50
      %p53 = scmp.ne.s32.totalorder %s36, %s52
      %p54 = scmp.eq.s32.totalorder %s28, 0
      %p55 = por %p53, %p54
      %s57 = sadd.s32 %s56, 1
      %p60 = scmp.eq.s32.totalorder %s22, 1
      %p61 = scmp.ne.s32.totalorder %s56, %s58
      %p62 = scmp.eq.s32.totalorder %s22, 0
      %p63 = por %p61, %p62
      %p64 = scmp.ne.s32.totalorder %s56, %s58
      %p65 = scmp.eq.s32.totalorder %s27, 1
      %p66 = por %p64, %p65
      %p67 = scmp.ne.s32.totalorder %s58, %s59
      %p68 = scmp.eq.s32.totalorder %s27, 0
      %p69 = por %p67, %p68
      %p70 = scmp.ne.s32.totalorder %s58, %s59
      %p71 = scmp.eq.s32.totalorder %s28, 1
      %p72 = por %p70, %p71
      %p74 = scmp.ne.s32.totalorder %s59, %s73
      %p75 = scmp.eq.s32.totalorder %s28, 0
      %p76 = por %p74, %p75
      %s78 = sadd.s32 %s77, 1
      %p81 = scmp.eq.s32.totalorder %s22, 1
      %p82 = scmp.ne.s32.totalorder %s77, %s79
      %p83 = scmp.eq.s32.totalorder %s22, 0
      %p84 = por %p82, %p83
      %p85 = scmp.ne.s32.totalorder %s77, %s79
      %p86 = scmp.eq.s32.totalorder %s27, 1
      %p87 = por %p85, %p86
      %p88 = scmp.ne.s32.totalorder %s79, %s80
      %p89 = scmp.eq.s32.totalorder %s27, 0
      %p90 = por %p88, %p89
      %p91 = scmp.ne.s32.totalorder %s79, %s80
      %p92 = scmp.eq.s32.totalorder %s28, 1
      %p93 = por %p91, %p92
      %p95 = scmp.ne.s32.totalorder %s80, %s94
      %p96 = scmp.eq.s32.totalorder %s28, 0
      %p97 = por %p95, %p96
      %s99 = sadd.s32 %s98, 1
      %p102 = scmp.eq.s32.totalorder %s22, 1
      %p103 = scmp.ne.s32.totalorder %s98, %s100
      %p104 = scmp.eq.s32.totalorder %s22, 0
      %p105 = por %p103, %p104
      %p106 = scmp.ne.s32.totalorder %s98, %s100
      %p107 = scmp.eq.s32.totalorder %s27, 1
      %p108 = por %p106, %p107
      %p109 = scmp.ne.s32.totalorder %s100, %s101
      %p110 = scmp.eq.s32.totalorder %s27, 0
      %p111 = por %p109, %p110
      %p112 = scmp.ne.s32.totalorder %s100, %s101
      %p113 = scmp.eq.s32.totalorder %s28, 1
      %p114 = por %p112, %p113
      %p116 = scmp.ne.s32.totalorder %s101, %s115
      %p117 = scmp.eq.s32.totalorder %s28, 0
      %p118 = por %p116, %p117
      %s120 = sadd.s32 %s119, 1
      %p123 = scmp.eq.s32.totalorder %s22, 1
      %p124 = scmp.ne.s32.totalorder %s119, %s121
      %p125 = scmp.eq.s32.totalorder %s22, 0
      %p126 = por %p124, %p125
      %p127 = scmp.ne.s32.totalorder %s119, %s121
      %p128 = scmp.eq.s32.totalorder %s27, 1
      %p129 = por %p127, %p128
      %p130 = scmp.ne.s32.totalorder %s121, %s122
      %p131 = scmp.eq.s32.totalorder %s27, 0
      %p132 = por %p130, %p131
      %p133 = scmp.ne.s32.totalorder %s121, %s122
      %p134 = scmp.eq.s32.totalorder %s28, 1
      %p135 = por %p133, %p134
      %p137 = scmp.ne.s32.totalorder %s122, %s136
      %p138 = scmp.eq.s32.totalorder %s28, 0
      %p139 = por %p137, %p138
      %s141 = sadd.s32 %s140, 1
      %p144 = scmp.eq.s32.totalorder %s22, 1
      %p145 = scmp.ne.s32.totalorder %s140, %s142
      %p146 = scmp.eq.s32.totalorder %s22, 0
      %p147 = por %p145, %p146
      %p148 = scmp.ne.s32.totalorder %s140, %s142
      %p149 = scmp.eq.s32.totalorder %s27, 1
      %p150 = por %p148, %p149
      %p151 = scmp.ne.s32.totalorder %s142, %s143
      %p152 = scmp.eq.s32.totalorder %s27, 0
      %p153 = por %p151, %p152
      %p154 = scmp.ne.s32.totalorder %s142, %s143
      %p155 = scmp.eq.s32.totalorder %s28, 1
      %p156 = por %p154, %p155
      %p158 = scmp.ne.s32.totalorder %s143, %s157
      %p159 = scmp.eq.s32.totalorder %s28, 0
      %p160 = por %p158, %p159
      %s161 = ssub.s32 %s22, %s29
      %p162 = scmp.eq.s32.totalorder %s161, 0
      %s164 = sadd.s32 %s163, 1
      %s165 = scalar_select %p162, %s163, %s164
      %p168 = pneg %p162
      %p169 = scmp.eq.s32.totalorder %s22, 1
      %p170 = por %p168, %p169
      %p171 = scmp.ne.s32.totalorder %s163, %s166
      %p172 = scmp.eq.s32.totalorder %s22, 0
      %p173 = por %p171, %p172
      %p174 = scmp.ne.s32.totalorder %s163, %s166
      %p175 = scmp.eq.s32.totalorder %s27, 1
      %p176 = por %p174, %p175
      %p177 = scmp.ne.s32.totalorder %s166, %s167
      %p178 = scmp.eq.s32.totalorder %s27, 0
      %p179 = por %p177, %p178
      %p180 = scmp.ne.s32.totalorder %s166, %s167
      %p181 = scmp.eq.s32.totalorder %s28, 1
      %p182 = por %p180, %p181
      %p184 = scmp.ne.s32.totalorder %s167, %s183
      %p185 = scmp.eq.s32.totalorder %s28, 0
      %p186 = por %p184, %p185
      %s187 = ssub.s32 %s22, %s29
      %p188 = scmp.eq.s32.totalorder %s187, 0
      %s190 = sadd.s32 %s189, 1
      %s191 = scalar_select %p188, %s189, %s190
      %p194 = pneg %p188
      %p195 = scmp.eq.s32.totalorder %s22, 1
      %p196 = por %p194, %p195
      %p197 = scmp.ne.s32.totalorder %s189, %s192
      %p198 = scmp.eq.s32.totalorder %s22, 0
      %p199 = por %p197, %p198
      %p200 = scmp.ne.s32.totalorder %s189, %s192
      %p201 = scmp.eq.s32.totalorder %s27, 1
      %p202 = por %p200, %p201
      %p203 = scmp.ne.s32.totalorder %s192, %s193
      %p204 = scmp.eq.s32.totalorder %s27, 0
      %p205 = por %p203, %p204
      %p206 = scmp.ne.s32.totalorder %s192, %s193
      %p207 = scmp.eq.s32.totalorder %s28, 1
      %p208 = por %p206, %p207
      %p210 = scmp.ne.s32.totalorder %s193, %s209
      %p211 = scmp.eq.s32.totalorder %s28, 0
      %p212 = por %p210, %p211
      %s213 = ssub.s32 %s22, %s29
      %p214 = scmp.eq.s32.totalorder %s213, 0
      %s216 = sadd.s32 %s215, 1
      %s217 = scalar_select %p214, %s215, %s216
      %p220 = pneg %p214
      %p221 = scmp.eq.s32.totalorder %s22, 1
      %p222 = por %p220, %p221
      %p223 = scmp.ne.s32.totalorder %s215, %s218
      %p224 = scmp.eq.s32.totalorder %s22, 0
      %p225 = por %p223, %p224
      %p226 = scmp.ne.s32.totalorder %s215, %s218
      %p227 = scmp.eq.s32.totalorder %s27, 1
      %p228 = por %p226, %p227
      %p229 = scmp.ne.s32.totalorder %s218, %s219
      %p230 = scmp.eq.s32.totalorder %s27, 0
      %p231 = por %p229, %p230
      %p232 = scmp.ne.s32.totalorder %s218, %s219
      %p233 = scmp.eq.s32.totalorder %s28, 1
      %p234 = por %p232, %p233
      %p236 = scmp.ne.s32.totalorder %s219, %s235
      %p237 = scmp.eq.s32.totalorder %s28, 0
      %p238 = por %p236, %p237
      %p239 = scmp.le.s32.totalorder 1, %s22
      %p240 = scmp.lt.s32.totalorder %s22, 3
      %p241 = pnand %p239, %p240
      %p242 = pneg %p241
      // Predicated region
      $region9: #{tpu_custom_call.1} parent=5 // pred_check
        _
      $region10: #{tpu_custom_call.1} parent=5 // pred_check_branch
        %244 = sbr.rel (%p241) target = $region12
      $region11: #{tpu_custom_call.1} parent=5 // pred_region
        %s245 = ssub.s32 %s22, 1
        // Predicated region
        $region13: #{tpu_custom_call.1} parent=11 // pred_check
          %p246 = pneg %p69
        $region14: #{tpu_custom_call.1} parent=11 // pred_check_branch
          %248 = sbr.rel (%p246) target = $region16
        $region15: #{tpu_custom_call.1} parent=11 // pred_region
          _
        $region16: #{tpu_custom_call.1} parent=11 // pred_fallthru
          _
        // Predicated region
        $region17: #{tpu_custom_call.1} parent=11 // pred_check
          %p249 = pneg %p90
        $region18: #{tpu_custom_call.1} parent=11 // pred_check_branch
          %251 = sbr.rel (%p249) target = $region20
        $region19: #{tpu_custom_call.1} parent=11 // pred_region
          _
        $region20: #{tpu_custom_call.1} parent=11 // pred_fallthru
          _
        // Predicated region
        $region21: #{tpu_custom_call.1} parent=11 // pred_check
          %p252 = pneg %p111
        $region22: #{tpu_custom_call.1} parent=11 // pred_check_branch
          %254 = sbr.rel (%p252) target = $region24
        $region23: #{tpu_custom_call.1} parent=11 // pred_region
          %s256 = ssub.s32 128, 128
          %257 = vsyncadd [#allocation3], %s256
          %s259 = sshll.u32 [#allocation2], 4
          %s260 = int_to_ptr.vmem [resolvable:$true] %s259
          %262 = dma.hbm_to_vmem [thread:$0]  %s3, 128, %s260, [#allocation3]
        $region24: #{tpu_custom_call.1} parent=11 // pred_fallthru
          _
        // Predicated region
        $region25: #{tpu_custom_call.1} parent=11 // pred_check
          %p263 = pneg %p132
        $region26: #{tpu_custom_call.1} parent=11 // pred_check_branch
          %265 = sbr.rel (%p263) target = $region28
        $region27: #{tpu_custom_call.1} parent=11 // pred_region
          _
        $region28: #{tpu_custom_call.1} parent=11 // pred_fallthru
          _
        // Predicated region
        $region29: #{tpu_custom_call.1} parent=11 // pred_check
          %p266 = pneg %p153
        $region30: #{tpu_custom_call.1} parent=11 // pred_check_branch
          %268 = sbr.rel (%p266) target = $region32
        $region31: #{tpu_custom_call.1} parent=11 // pred_region
          _
        $region32: #{tpu_custom_call.1} parent=11 // pred_fallthru
          _
      $region12: #{tpu_custom_call.1} parent=5 // pred_fallthru
        _
      %p269 = scmp.lt.s32.totalorder %s22, 2
      // Predicated region
      $region33: #{tpu_custom_call.1} parent=5 // pred_check
        %p270 = pneg %p269
      $region34: #{tpu_custom_call.1} parent=5 // pred_check_branch
        %272 = sbr.rel (%p270) target = $region36
      $region35: #{tpu_custom_call.1} parent=5 // pred_region
        // Predicated region
        $region37: #{tpu_custom_call.1} parent=35 // pred_check
          %p273 = pneg %p42
        $region38: #{tpu_custom_call.1} parent=35 // pred_check_branch
          %275 = sbr.rel (%p273) target = $region40
        $region39: #{tpu_custom_call.1} parent=35 // pred_region
          %s276 = smul.u32 2, %s22
          %p277 = scmp.lt.s32.totalorder %s276, 3
          %s278 = scalar_select %p277, %s276, 3
          %s279 = smul.addr %s278, 8
          %s280 = scalar_lea.vmem %s0, %s279
          %s281 = smul.u32 2, %s22
        $region40: #{tpu_custom_call.1} parent=35 // pred_fallthru
          _
      $region36: #{tpu_custom_call.1} parent=5 // pred_fallthru
        _
      %p282 = scmp.le.s32.totalorder 1, %s22
      %p283 = scmp.lt.s32.totalorder %s22, 3
      %p284 = pnand %p282, %p283
      %p285 = pneg %p284
      // Predicated region
      $region41: #{tpu_custom_call.1} parent=5 // pred_check
        _
      $region42: #{tpu_custom_call.1} parent=5 // pred_check_branch
        %287 = sbr.rel (%p284) target = $region44
      $region43: #{tpu_custom_call.1} parent=5 // pred_region
        %s288 = ssub.s32 %s22, 1
        // Predicated region
        $region45: #{tpu_custom_call.1} parent=43 // pred_check
          %p289 = pneg %p111
        $region46: #{tpu_custom_call.1} parent=43 // pred_check_branch
          %291 = sbr.rel (%p289) target = $region48
        $region47: #{tpu_custom_call.1} parent=43 // pred_region
          %292 = dma.done [#allocation3], 128
        $region48: #{tpu_custom_call.1} parent=43 // pred_fallthru
          _
        %s293 = smul.u32 2, %s27
        %p294 = scmp.lt.s32.totalorder %s293, 3
        %s295 = scalar_select %p294, %s293, 3
        %s296 = smul.addr %s295, 8
        %s297 = scalar_lea.vmem %s0, %s296
        %p298 = pneg %p48
        %p299 = pneg %p45
        %p300 = pneg %p69
        %p301 = pneg %p66
        %p302 = pneg %p90
        %p303 = pneg %p87
        %p304 = pneg %p111
        %p305 = pneg %p108
        %p306 = pneg %p132
        %p307 = pneg %p129
        %p308 = pneg %p153
        %p309 = pneg %p150
        %p310 = pneg %p179
        %p311 = pneg %p176
        %s312 = sand.u32 %s166, 1
        %s313 = scalar_lea.sflag [#allocation4], %s312
        %s314 = sand.u32 %s166, 1
        %s315 = smul.addr %s314, 16
        %s316 = scalar_lea.vmem [#allocation5], %s315
        %p317 = pneg %p205
        %p318 = pneg %p202
        %s319 = sand.u32 %s27, 1
        %s320 = scalar_lea.sflag [#allocation7], %s319
        %s321 = sand.u32 %s192, 1
        %s322 = smul.addr %s321, 16
        %s323 = scalar_lea.vmem [#allocation6], %s322
        %p324 = pneg %p231
        %p325 = pneg %p228
        %s326 = sand.u32 %s27, 1
        %s327 = scalar_lea.sflag [#allocation7], %s326
        %s328 = sand.u32 %s218, 1
        %s329 = smul.addr %s328, 4
        %s330 = scalar_lea.vmem [#allocation8], %s329
        %s331 = smul.u32 2, %s27
        %p332 = scmp.lt.s32.totalorder %s331, 3
        %s333 = scalar_select %p332, %s331, 3
        %s334 = smul.addr %s333, 8
        %s335 = scalar_lea.vmem %s0, %s334
        %s336 = smul.u32 2, %s27
        %s337 = smul.u32 2, %s27
        %s338 = smul.u32 2, %s27
        %s339 = smul.u32 2, %s27
        %v340 = vld [vmem:[%s1] sm:$0xff]
        %v341 = vld [vmem:[%s2] sm:$0xff]
        %v342 = vld [vmem:[#allocation2] sm:$0xff]
        %v343 = vld [vmem:[%s4] sm:$0xff]
        %v344 = vld [vmem:[%s4 + $0x8] sm:$0xff]
        %v345 = vld [vmem:[%s5] sm:$0xff]
        %v346 = vld [vmem:[%s5 + $0x8] sm:$0xff]
        %v347 = vld [vmem:[%s335] sm:$0xff]
        %349 = vset.pattern.permute.xlu0 0
        %350 = vperm.xlu0 %349, %v340
        %v351 = vpop.permute.xlu0 %350
        %vm353 = vcmp.ge.f32.partialorder %v347, %v351
        %354 = vset.pattern.permute.xlu0 1
        %355 = vperm.xlu0 %354, %v340
        %v356 = vpop.permute.xlu0 %355
        %vm358 = vcmp.ge.f32.partialorder %v347, %v356
        %359 = vset.pattern.permute.xlu0 2
        %360 = vperm.xlu0 %359, %v340
        %v361 = vpop.permute.xlu0 %360
        %vm363 = vcmp.ge.f32.partialorder %v347, %v361
        %364 = vset.pattern.permute.xlu0 3
        %365 = vperm.xlu0 %364, %v340
        %v366 = vpop.permute.xlu0 %365
        %vm368 = vcmp.ge.f32.partialorder %v347, %v366
        %369 = vset.pattern.permute.xlu0 4
        %370 = vperm.xlu0 %369, %v340
        %v371 = vpop.permute.xlu0 %370
        %vm373 = vcmp.ge.f32.partialorder %v347, %v371
        %374 = vset.pattern.permute.xlu0 5
        %375 = vperm.xlu0 %374, %v340
        %v376 = vpop.permute.xlu0 %375
        %vm378 = vcmp.ge.f32.partialorder %v347, %v376
        %379 = vset.pattern.permute.xlu0 6
        %380 = vperm.xlu0 %379, %v340
        %v381 = vpop.permute.xlu0 %380
        %vm383 = vcmp.ge.f32.partialorder %v347, %v381
        %384 = vset.pattern.permute.xlu0 7
        %385 = vperm.xlu0 %384, %v340
        %v386 = vpop.permute.xlu0 %385
        %vm388 = vcmp.ge.f32.partialorder %v347, %v386
        %389 = vset.pattern.permute.xlu0 8
        %390 = vperm.xlu0 %389, %v340
        %v391 = vpop.permute.xlu0 %390
        %vm393 = vcmp.ge.f32.partialorder %v347, %v391
        %394 = vset.pattern.permute.xlu0 9
        %395 = vperm.xlu0 %394, %v340
        %v396 = vpop.permute.xlu0 %395
        %vm398 = vcmp.ge.f32.partialorder %v347, %v396
        %399 = vset.pattern.permute.xlu0 10
        %400 = vperm.xlu0 %399, %v340
        %v401 = vpop.permute.xlu0 %400
        %vm403 = vcmp.ge.f32.partialorder %v347, %v401
        %404 = vset.pattern.permute.xlu0 11
        %405 = vperm.xlu0 %404, %v340
        %v406 = vpop.permute.xlu0 %405
        %vm408 = vcmp.ge.f32.partialorder %v347, %v406
        %vm409 = vmxor %vm358, 1
        %vm410 = vmand %vm353, %vm409
        %v411 = vsel %vm410, 1, 0
        %v412 = vcvt.s32.f32 %v411
        %vm413 = vmxor %vm363, 1
        %vm414 = vmand %vm358, %vm413
        %v415 = vsel %vm414, 1, 0
        %v416 = vcvt.s32.f32 %v415
        %vm417 = vmxor %vm368, 1
        %vm418 = vmand %vm363, %vm417
        %v419 = vsel %vm418, 1, 0
        %v420 = vcvt.s32.f32 %v419
        %vm421 = vmxor %vm373, 1
        %vm422 = vmand %vm368, %vm421
        %v423 = vsel %vm422, 1, 0
        %v424 = vcvt.s32.f32 %v423
        %vm425 = vmxor %vm378, 1
        %vm426 = vmand %vm373, %vm425
        %v427 = vsel %vm426, 1, 0
        %v428 = vcvt.s32.f32 %v427
        %vm429 = vmxor %vm383, 1
        %vm430 = vmand %vm378, %vm429
        %v431 = vsel %vm430, 1, 0
        %v432 = vcvt.s32.f32 %v431
        %vm433 = vmxor %vm388, 1
        %vm434 = vmand %vm383, %vm433
        %v435 = vsel %vm434, 1, 0
        %v436 = vcvt.s32.f32 %v435
        %vm437 = vmxor %vm393, 1
        %vm438 = vmand %vm388, %vm437
        %v439 = vsel %vm438, 1, 0
        %v440 = vcvt.s32.f32 %v439
        %vm441 = vmxor %vm398, 1
        %vm442 = vmand %vm393, %vm441
        %v443 = vsel %vm442, 1, 0
        %v444 = vcvt.s32.f32 %v443
        %vm445 = vmxor %vm403, 1
        %vm446 = vmand %vm398, %vm445
        %v447 = vsel %vm446, 1, 0
        %v448 = vcvt.s32.f32 %v447
        %vm449 = vmxor %vm408, 1
        %vm450 = vmand %vm403, %vm449
        %v451 = vsel %vm450, 1, 0
        %v452 = vcvt.s32.f32 %v451
        %454 = vset.pattern.permute.xlu0 0
        %455 = vperm.xlu0 %454, %v341
        %v456 = vpop.permute.xlu0 %455
        %v458 = vmul.f32 %v347, %v456
        %460 = vset.pattern.permute.xlu0 0
        %461 = vperm.xlu0 %460, %v342
        %v462 = vpop.permute.xlu0 %461
        %v464 = vadd.f32 %v458, %v462
        %465 = vset.pattern.permute.xlu0 1
        %466 = vperm.xlu0 %465, %v341
        %v467 = vpop.permute.xlu0 %466
        %v469 = vmul.f32 %v347, %v467
        %470 = vset.pattern.permute.xlu0 1
        %471 = vperm.xlu0 %470, %v342
        %v472 = vpop.permute.xlu0 %471
        %v474 = vadd.f32 %v469, %v472
        %475 = vset.pattern.permute.xlu0 2
        %476 = vperm.xlu0 %475, %v341
        %v477 = vpop.permute.xlu0 %476
        %v479 = vmul.f32 %v347, %v477
        %480 = vset.pattern.permute.xlu0 2
        %481 = vperm.xlu0 %480, %v342
        %v482 = vpop.permute.xlu0 %481
        %v484 = vadd.f32 %v479, %v482
        %485 = vset.pattern.permute.xlu0 3
        %486 = vperm.xlu0 %485, %v341
        %v487 = vpop.permute.xlu0 %486
        %v489 = vmul.f32 %v347, %v487
        %490 = vset.pattern.permute.xlu0 3
        %491 = vperm.xlu0 %490, %v342
        %v492 = vpop.permute.xlu0 %491
        %v494 = vadd.f32 %v489, %v492
        %495 = vset.pattern.permute.xlu0 4
        %496 = vperm.xlu0 %495, %v341
        %v497 = vpop.permute.xlu0 %496
        %v499 = vmul.f32 %v347, %v497
        %500 = vset.pattern.permute.xlu0 4
        %501 = vperm.xlu0 %500, %v342
        %v502 = vpop.permute.xlu0 %501
        %v504 = vadd.f32 %v499, %v502
        %505 = vset.pattern.permute.xlu0 5
        %506 = vperm.xlu0 %505, %v341
        %v507 = vpop.permute.xlu0 %506
        %v509 = vmul.f32 %v347, %v507
        %510 = vset.pattern.permute.xlu0 5
        %511 = vperm.xlu0 %510, %v342
        %v512 = vpop.permute.xlu0 %511
        %v514 = vadd.f32 %v509, %v512
        %515 = vset.pattern.permute.xlu0 6
        %516 = vperm.xlu0 %515, %v341
        %v517 = vpop.permute.xlu0 %516
        %v519 = vmul.f32 %v347, %v517
        %520 = vset.pattern.permute.xlu0 6
        %521 = vperm.xlu0 %520, %v342
        %v522 = vpop.permute.xlu0 %521
        %v524 = vadd.f32 %v519, %v522
        %525 = vset.pattern.permute.xlu0 7
        %526 = vperm.xlu0 %525, %v341
        %v527 = vpop.permute.xlu0 %526
        %v529 = vmul.f32 %v347, %v527
        %530 = vset.pattern.permute.xlu0 7
        %531 = vperm.xlu0 %530, %v342
        %v532 = vpop.permute.xlu0 %531
        %v534 = vadd.f32 %v529, %v532
        %535 = vset.pattern.permute.xlu0 8
        %536 = vperm.xlu0 %535, %v341
        %v537 = vpop.permute.xlu0 %536
        %v539 = vmul.f32 %v347, %v537
        %540 = vset.pattern.permute.xlu0 8
        %541 = vperm.xlu0 %540, %v342
        %v542 = vpop.permute.xlu0 %541
        %v544 = vadd.f32 %v539, %v542
        %545 = vset.pattern.permute.xlu0 9
        %546 = vperm.xlu0 %545, %v341
        %v547 = vpop.permute.xlu0 %546
        %v549 = vmul.f32 %v347, %v547
        %550 = vset.pattern.permute.xlu0 9
        %551 = vperm.xlu0 %550, %v342
        %v552 = vpop.permute.xlu0 %551
        %v554 = vadd.f32 %v549, %v552
        %555 = vset.pattern.permute.xlu0 10
        %556 = vperm.xlu0 %555, %v341
        %v557 = vpop.permute.xlu0 %556
        %v559 = vmul.f32 %v347, %v557
        %560 = vset.pattern.permute.xlu0 10
        %561 = vperm.xlu0 %560, %v342
        %v562 = vpop.permute.xlu0 %561
        %v564 = vadd.f32 %v559, %v562
        %v565 = vmul.f32 %v464, %v412
        %v566 = vsub.f32 1.0, %v474
        %v567 = vmul.f32 %v566, %v416
        %v568 = vadd.f32 %v565, %v567
        %v569 = vmul.f32 %v474, %v416
        %v570 = vsub.f32 1.0, %v484
        %v571 = vmul.f32 %v570, %v420
        %v572 = vadd.f32 %v569, %v571
        %v573 = vmul.f32 %v484, %v420
        %v574 = vsub.f32 1.0, %v494
        %v575 = vmul.f32 %v574, %v424
        %v576 = vadd.f32 %v573, %v575
        %v577 = vmul.f32 %v494, %v424
        %v578 = vsub.f32 1.0, %v504
        %v579 = vmul.f32 %v578, %v428
        %v580 = vadd.f32 %v577, %v579
        %v581 = vmul.f32 %v504, %v428
        %v582 = vsub.f32 1.0, %v514
        %v583 = vmul.f32 %v582, %v432
        %v584 = vadd.f32 %v581, %v583
        %v585 = vmul.f32 %v514, %v432
        %v586 = vsub.f32 1.0, %v524
        %v587 = vmul.f32 %v586, %v436
        %v588 = vadd.f32 %v585, %v587
        %v589 = vmul.f32 %v524, %v436
        %v590 = vsub.f32 1.0, %v534
        %v591 = vmul.f32 %v590, %v440
        %v592 = vadd.f32 %v589, %v591
        %v593 = vmul.f32 %v534, %v440
        %v594 = vsub.f32 1.0, %v544
        %v595 = vmul.f32 %v594, %v444
        %v596 = vadd.f32 %v593, %v595
        %v597 = vmul.f32 %v544, %v444
        %v598 = vsub.f32 1.0, %v554
        %v599 = vmul.f32 %v598, %v448
        %v600 = vadd.f32 %v597, %v599
        %v601 = vmul.f32 %v554, %v448
        %v602 = vsub.f32 1.0, %v564
        %v603 = vmul.f32 %v602, %v452
        %v604 = vadd.f32 %v601, %v603
        %605 = vset.pattern.permute.xlu0 11
        %606 = vperm.xlu0 %605, %v341
        %v607 = vpop.permute.xlu0 %606
        %v609 = vmul.f32 %v347, %v607
        %610 = vset.pattern.permute.xlu0 11
        %611 = vperm.xlu0 %610, %v342
        %v612 = vpop.permute.xlu0 %611
        %v614 = vadd.f32 %v609, %v612
        %615 = vset.pattern.permute.xlu0 12
        %616 = vperm.xlu0 %615, %v341
        %v617 = vpop.permute.xlu0 %616
        %v619 = vmul.f32 %v347, %v617
        %620 = vset.pattern.permute.xlu0 12
        %621 = vperm.xlu0 %620, %v342
        %v622 = vpop.permute.xlu0 %621
        %v624 = vadd.f32 %v619, %v622
        %625 = vset.pattern.permute.xlu0 13
        %626 = vperm.xlu0 %625, %v341
        %v627 = vpop.permute.xlu0 %626
        %v629 = vmul.f32 %v347, %v627
        %630 = vset.pattern.permute.xlu0 13
        %631 = vperm.xlu0 %630, %v342
        %v632 = vpop.permute.xlu0 %631
        %v634 = vadd.f32 %v629, %v632
        %635 = vset.pattern.permute.xlu0 14
        %636 = vperm.xlu0 %635, %v341
        %v637 = vpop.permute.xlu0 %636
        %v639 = vmul.f32 %v347, %v637
        %640 = vset.pattern.permute.xlu0 14
        %641 = vperm.xlu0 %640, %v342
        %v642 = vpop.permute.xlu0 %641
        %v644 = vadd.f32 %v639, %v642
        %645 = vset.pattern.permute.xlu0 15
        %646 = vperm.xlu0 %645, %v341
        %v647 = vpop.permute.xlu0 %646
        %v649 = vmul.f32 %v347, %v647
        %650 = vset.pattern.permute.xlu0 15
        %651 = vperm.xlu0 %650, %v342
        %v652 = vpop.permute.xlu0 %651
        %v654 = vadd.f32 %v649, %v652
        %655 = vset.pattern.permute.xlu0 16
        %656 = vperm.xlu0 %655, %v341
        %v657 = vpop.permute.xlu0 %656
        %v659 = vmul.f32 %v347, %v657
        %660 = vset.pattern.permute.xlu0 16
        %661 = vperm.xlu0 %660, %v342
        %v662 = vpop.permute.xlu0 %661
        %v664 = vadd.f32 %v659, %v662
        %665 = vset.pattern.permute.xlu0 17
        %666 = vperm.xlu0 %665, %v341
        %v667 = vpop.permute.xlu0 %666
        %v669 = vmul.f32 %v347, %v667
        %670 = vset.pattern.permute.xlu0 17
        %671 = vperm.xlu0 %670, %v342
        %v672 = vpop.permute.xlu0 %671
        %v674 = vadd.f32 %v669, %v672
        %675 = vset.pattern.permute.xlu0 18
        %676 = vperm.xlu0 %675, %v341
        %v677 = vpop.permute.xlu0 %676
        %v679 = vmul.f32 %v347, %v677
        %680 = vset.pattern.permute.xlu0 18
        %681 = vperm.xlu0 %680, %v342
        %v682 = vpop.permute.xlu0 %681
        %v684 = vadd.f32 %v679, %v682
        %685 = vset.pattern.permute.xlu0 19
        %686 = vperm.xlu0 %685, %v341
        %v687 = vpop.permute.xlu0 %686
        %v689 = vmul.f32 %v347, %v687
        %690 = vset.pattern.permute.xlu0 19
        %691 = vperm.xlu0 %690, %v342
        %v692 = vpop.permute.xlu0 %691
        %v694 = vadd.f32 %v689, %v692
        %695 = vset.pattern.permute.xlu0 20
        %696 = vperm.xlu0 %695, %v341
        %v697 = vpop.permute.xlu0 %696
        %v699 = vmul.f32 %v347, %v697
        %700 = vset.pattern.permute.xlu0 20
        %701 = vperm.xlu0 %700, %v342
        %v702 = vpop.permute.xlu0 %701
        %v704 = vadd.f32 %v699, %v702
        %v705 = vmul.f32 %v614, %v568
        %v706 = vsub.f32 1.0, %v624
        %v707 = vmul.f32 %v706, %v572
        %v708 = vadd.f32 %v705, %v707
        %v709 = vmul.f32 %v624, %v572
        %v710 = vsub.f32 1.0, %v634
        %v711 = vmul.f32 %v710, %v576
        %v712 = vadd.f32 %v709, %v711
        %v713 = vmul.f32 %v634, %v576
        %v714 = vsub.f32 1.0, %v644
        %v715 = vmul.f32 %v714, %v580
        %v716 = vadd.f32 %v713, %v715
        %v717 = vmul.f32 %v644, %v580
        %v718 = vsub.f32 1.0, %v654
        %v719 = vmul.f32 %v718, %v584
        %v720 = vadd.f32 %v717, %v719
        %v721 = vmul.f32 %v654, %v584
        %v722 = vsub.f32 1.0, %v664
        %v723 = vmul.f32 %v722, %v588
        %v724 = vadd.f32 %v721, %v723
        %v725 = vmul.f32 %v664, %v588
        %v726 = vsub.f32 1.0, %v674
        %v727 = vmul.f32 %v726, %v592
        %v728 = vadd.f32 %v725, %v727
        %v729 = vmul.f32 %v674, %v592
        %v730 = vsub.f32 1.0, %v684
        %v731 = vmul.f32 %v730, %v596
        %v732 = vadd.f32 %v729, %v731
        %v733 = vmul.f32 %v684, %v596
        %v734 = vsub.f32 1.0, %v694
        %v735 = vmul.f32 %v734, %v600
        %v736 = vadd.f32 %v733, %v735
        %v737 = vmul.f32 %v694, %v600
        %v738 = vsub.f32 1.0, %v704
        %v739 = vmul.f32 %v738, %v604
        %v740 = vadd.f32 %v737, %v739
        %741 = vset.pattern.permute.xlu0 21
        %742 = vperm.xlu0 %741, %v341
        %v743 = vpop.permute.xlu0 %742
        %v745 = vmul.f32 %v347, %v743
        %746 = vset.pattern.permute.xlu0 21
        %747 = vperm.xlu0 %746, %v342
        %v748 = vpop.permute.xlu0 %747
        %v750 = vadd.f32 %v745, %v748
        %751 = vset.pattern.permute.xlu0 22
        %752 = vperm.xlu0 %751, %v341
        %v753 = vpop.permute.xlu0 %752
        %v755 = vmul.f32 %v347, %v753
        %756 = vset.pattern.permute.xlu0 22
        %757 = vperm.xlu0 %756, %v342
        %v758 = vpop.permute.xlu0 %757
        %v760 = vadd.f32 %v755, %v758
        %761 = vset.pattern.permute.xlu0 23
        %762 = vperm.xlu0 %761, %v341
        %v763 = vpop.permute.xlu0 %762
        %v765 = vmul.f32 %v347, %v763
        %766 = vset.pattern.permute.xlu0 23
        %767 = vperm.xlu0 %766, %v342
        %v768 = vpop.permute.xlu0 %767
        %v770 = vadd.f32 %v765, %v768
        %771 = vset.pattern.permute.xlu0 24
        %772 = vperm.xlu0 %771, %v341
        %v773 = vpop.permute.xlu0 %772
        %v775 = vmul.f32 %v347, %v773
        %776 = vset.pattern.permute.xlu0 24
        %777 = vperm.xlu0 %776, %v342
        %v778 = vpop.permute.xlu0 %777
        %v780 = vadd.f32 %v775, %v778
        %781 = vset.pattern.permute.xlu0 25
        %782 = vperm.xlu0 %781, %v341
        %v783 = vpop.permute.xlu0 %782
        %v785 = vmul.f32 %v347, %v783
        %786 = vset.pattern.permute.xlu0 25
        %787 = vperm.xlu0 %786, %v342
        %v788 = vpop.permute.xlu0 %787
        %v790 = vadd.f32 %v785, %v788
        %791 = vset.pattern.permute.xlu0 26
        %792 = vperm.xlu0 %791, %v341
        %v793 = vpop.permute.xlu0 %792
        %v795 = vmul.f32 %v347, %v793
        %796 = vset.pattern.permute.xlu0 26
        %797 = vperm.xlu0 %796, %v342
        %v798 = vpop.permute.xlu0 %797
        %v800 = vadd.f32 %v795, %v798
        %801 = vset.pattern.permute.xlu0 27
        %802 = vperm.xlu0 %801, %v341
        %v803 = vpop.permute.xlu0 %802
        %v805 = vmul.f32 %v347, %v803
        %806 = vset.pattern.permute.xlu0 27
        %807 = vperm.xlu0 %806, %v342
        %v808 = vpop.permute.xlu0 %807
        %v810 = vadd.f32 %v805, %v808
        %811 = vset.pattern.permute.xlu0 28
        %812 = vperm.xlu0 %811, %v341
        %v813 = vpop.permute.xlu0 %812
        %v815 = vmul.f32 %v347, %v813
        %816 = vset.pattern.permute.xlu0 28
        %817 = vperm.xlu0 %816, %v342
        %v818 = vpop.permute.xlu0 %817
        %v820 = vadd.f32 %v815, %v818
        %821 = vset.pattern.permute.xlu0 29
        %822 = vperm.xlu0 %821, %v341
        %v823 = vpop.permute.xlu0 %822
        %v825 = vmul.f32 %v347, %v823
        %826 = vset.pattern.permute.xlu0 29
        %827 = vperm.xlu0 %826, %v342
        %v828 = vpop.permute.xlu0 %827
        %v830 = vadd.f32 %v825, %v828
        %v831 = vmul.f32 %v750, %v708
        %v832 = vsub.f32 1.0, %v760
        %v833 = vmul.f32 %v832, %v712
        %v834 = vadd.f32 %v831, %v833
        %v835 = vmul.f32 %v760, %v712
        %v836 = vsub.f32 1.0, %v770
        %v837 = vmul.f32 %v836, %v716
        %v838 = vadd.f32 %v835, %v837
        %v839 = vmul.f32 %v770, %v716
        %v840 = vsub.f32 1.0, %v780
        %v841 = vmul.f32 %v840, %v720
        %v842 = vadd.f32 %v839, %v841
        %v843 = vmul.f32 %v780, %v720
        %v844 = vsub.f32 1.0, %v790
        %v845 = vmul.f32 %v844, %v724
        %v846 = vadd.f32 %v843, %v845
        %v847 = vmul.f32 %v790, %v724
        %v848 = vsub.f32 1.0, %v800
        %v849 = vmul.f32 %v848, %v728
        %v850 = vadd.f32 %v847, %v849
        %v851 = vmul.f32 %v800, %v728
        %v852 = vsub.f32 1.0, %v810
        %v853 = vmul.f32 %v852, %v732
        %v854 = vadd.f32 %v851, %v853
        %v855 = vmul.f32 %v810, %v732
        %v856 = vsub.f32 1.0, %v820
        %v857 = vmul.f32 %v856, %v736
        %v858 = vadd.f32 %v855, %v857
        %v859 = vmul.f32 %v820, %v736
        %v860 = vsub.f32 1.0, %v830
        %v861 = vmul.f32 %v860, %v740
        %v862 = vadd.f32 %v859, %v861
        %v863 = vxor.u32 %v347, 2147483648
        %v864 = vmul.f32 %v863, 1.442695
        %v865 = vpow.pop %v864
        %v866 = vadd.f32 %v865, 1.0
        %v867 = vrcp.pop %v866
        %v868 = vmul.f32 1.0, %v867
        %v869 = vmul.f32 %v347, %v868
        %871 = vset.pattern.permute.xlu0 0
        %872 = vperm.xlu0 %871, %v343
        %v873 = vpop.permute.xlu0 %872
        %v875 = vmul.f32 %v873, %v834
        %876 = vset.pattern.permute.xlu0 1
        %877 = vperm.xlu0 %876, %v343
        %v878 = vpop.permute.xlu0 %877
        %v880 = vmul.f32 %v878, %v838
        %v881 = vadd.f32 %v875, %v880
        %882 = vset.pattern.permute.xlu0 2
        %883 = vperm.xlu0 %882, %v343
        %v884 = vpop.permute.xlu0 %883
        %v886 = vmul.f32 %v884, %v842
        %v887 = vadd.f32 %v881, %v886
        %888 = vset.pattern.permute.xlu0 3
        %889 = vperm.xlu0 %888, %v343
        %v890 = vpop.permute.xlu0 %889
        %v892 = vmul.f32 %v890, %v846
        %v893 = vadd.f32 %v887, %v892
        %894 = vset.pattern.permute.xlu0 4
        %895 = vperm.xlu0 %894, %v343
        %v896 = vpop.permute.xlu0 %895
        %v898 = vmul.f32 %v896, %v850
        %v899 = vadd.f32 %v893, %v898
        %900 = vset.pattern.permute.xlu0 5
        %901 = vperm.xlu0 %900, %v343
        %v902 = vpop.permute.xlu0 %901
        %v904 = vmul.f32 %v902, %v854
        %v905 = vadd.f32 %v899, %v904
        %906 = vset.pattern.permute.xlu0 6
        %907 = vperm.xlu0 %906, %v343
        %v908 = vpop.permute.xlu0 %907
        %v910 = vmul.f32 %v908, %v858
        %v911 = vadd.f32 %v905, %v910
        %912 = vset.pattern.permute.xlu0 7
        %913 = vperm.xlu0 %912, %v343
        %v914 = vpop.permute.xlu0 %913
        %v916 = vmul.f32 %v914, %v862
        %v917 = vadd.f32 %v911, %v916
        %919 = vset.pattern.permute.xlu0 0
        %920 = vperm.xlu0 %919, %v345
        %v921 = vpop.permute.xlu0 %920
        %v923 = vmul.f32 %v921, %v869
        %924 = vset.pattern.permute.xlu0 1
        %925 = vperm.xlu0 %924, %v345
        %v926 = vpop.permute.xlu0 %925
        %v928 = vmul.f32 %v926, %v917
        %v929 = vadd.f32 %v923, %v928
        %930 = vst [vmem:[%s316] sm:$0xf] %v917
        %931 = vst [vmem:[%s323] sm:$0xf] %v929
        %v932 = vrot.slane %v929, 4
        %v933 = vadd.f32 %v929, %v932
        %v934 = vrot.slane %v933, 2
        %v935 = vadd.f32 %v933, %v934
        %v936 = vrot.slane %v935, 1
        %v937 = vadd.f32 %v935, %v936
        %939 = vset.pattern.permute.xlu0 0
        %940 = vperm.xlu0 %939, %v344
        %v941 = vpop.permute.xlu0 %940
        %v943 = vmul.f32 %v941, %v834
        %944 = vset.pattern.permute.xlu0 1
        %945 = vperm.xlu0 %944, %v344
        %v946 = vpop.permute.xlu0 %945
        %v948 = vmul.f32 %v946, %v838
        %v949 = vadd.f32 %v943, %v948
        %950 = vset.pattern.permute.xlu0 2
        %951 = vperm.xlu0 %950, %v344
        %v952 = vpop.permute.xlu0 %951
        %v954 = vmul.f32 %v952, %v842
        %v955 = vadd.f32 %v949, %v954
        %956 = vset.pattern.permute.xlu0 3
        %957 = vperm.xlu0 %956, %v344
        %v958 = vpop.permute.xlu0 %957
        %v960 = vmul.f32 %v958, %v846
        %v961 = vadd.f32 %v955, %v960
        %962 = vset.pattern.permute.xlu0 4
        %963 = vperm.xlu0 %962, %v344
        %v964 = vpop.permute.xlu0 %963
        %v966 = vmul.f32 %v964, %v850
        %v967 = vadd.f32 %v961, %v966
        %968 = vset.pattern.permute.xlu0 5
        %969 = vperm.xlu0 %968, %v344
        %v970 = vpop.permute.xlu0 %969
        %v972 = vmul.f32 %v970, %v854
        %v973 = vadd.f32 %v967, %v972
        %974 = vset.pattern.permute.xlu0 6
        %975 = vperm.xlu0 %974, %v344
        %v976 = vpop.permute.xlu0 %975
        %v978 = vmul.f32 %v976, %v858
        %v979 = vadd.f32 %v973, %v978
        %980 = vset.pattern.permute.xlu0 7
        %981 = vperm.xlu0 %980, %v344
        %v982 = vpop.permute.xlu0 %981
        %v984 = vmul.f32 %v982, %v862
        %v985 = vadd.f32 %v979, %v984
        %987 = vset.pattern.permute.xlu0 0
        %988 = vperm.xlu0 %987, %v346
        %v989 = vpop.permute.xlu0 %988
        %v991 = vmul.f32 %v989, %v869
        %992 = vset.pattern.permute.xlu0 1
        %993 = vperm.xlu0 %992, %v346
        %v994 = vpop.permute.xlu0 %993
        %v996 = vmul.f32 %v994, %v985
        %v997 = vadd.f32 %v991, %v996
        %s998 = sadd.s32 0, 2
        %s999 = smul.addr %s998, 4
        %s1000 = scalar_lea.vmem %s316, %s999 [#allocation5]
        %1001 = vst [vmem:[%s1000] sm:$0xf] %v985
        %s1002 = smul.addr %s998, 4
        %s1003 = scalar_lea.vmem %s323, %s1002 [#allocation6]
        %1004 = vst [vmem:[%s1003] sm:$0xf] %v997
        %v1005 = vrot.slane %v997, 4
        %v1006 = vadd.f32 %v997, %v1005
        %v1007 = vrot.slane %v1006, 2
        %v1008 = vadd.f32 %v1006, %v1007
        %v1009 = vrot.slane %v1008, 1
        %v1010 = vadd.f32 %v1008, %v1009
        %vm1011 = vcmask 1040384
        %v1012 = vsel %vm1011, %v937, %v1010
        %1013 = vst [vmem:[%s330] sm:$0x3] %v1012
        %s1014 = scalar_lea.vmem %s335, 8
        %v1015 = vld [vmem:[%s1014] sm:$0xff]
        %vm1016 = vcmp.ge.f32.partialorder %v1015, %v351
        %vm1017 = vcmp.ge.f32.partialorder %v1015, %v356
        %vm1018 = vcmp.ge.f32.partialorder %v1015, %v361
        %vm1019 = vcmp.ge.f32.partialorder %v1015, %v366
        %vm1020 = vcmp.ge.f32.partialorder %v1015, %v371
        %vm1021 = vcmp.ge.f32.partialorder %v1015, %v376
        %vm1022 = vcmp.ge.f32.partialorder %v1015, %v381
        %vm1023 = vcmp.ge.f32.partialorder %v1015, %v386
        %vm1024 = vcmp.ge.f32.partialorder %v1015, %v391
        %vm1025 = vcmp.ge.f32.partialorder %v1015, %v396
        %vm1026 = vcmp.ge.f32.partialorder %v1015, %v401
        %vm1027 = vcmp.ge.f32.partialorder %v1015, %v406
        %vm1028 = vmxor %vm1017, 1
        %vm1029 = vmand %vm1016, %vm1028
        %v1030 = vsel %vm1029, 1, 0
        %v1031 = vcvt.s32.f32 %v1030
        %vm1032 = vmxor %vm1018, 1
        %vm1033 = vmand %vm1017, %vm1032
        %v1034 = vsel %vm1033, 1, 0
        %v1035 = vcvt.s32.f32 %v1034
        %vm1036 = vmxor %vm1019, 1
        %vm1037 = vmand %vm1018, %vm1036
        %v1038 = vsel %vm1037, 1, 0
        %v1039 = vcvt.s32.f32 %v1038
        %vm1040 = vmxor %vm1020, 1
        %vm1041 = vmand %vm1019, %vm1040
        %v1042 = vsel %vm1041, 1, 0
        %v1043 = vcvt.s32.f32 %v1042
        %vm1044 = vmxor %vm1021, 1
        %vm1045 = vmand %vm1020, %vm1044
        %v1046 = vsel %vm1045, 1, 0
        %v1047 = vcvt.s32.f32 %v1046
        %vm1048 = vmxor %vm1022, 1
        %vm1049 = vmand %vm1021, %vm1048
        %v1050 = vsel %vm1049, 1, 0
        %v1051 = vcvt.s32.f32 %v1050
        %vm1052 = vmxor %vm1023, 1
        %vm1053 = vmand %vm1022, %vm1052
        %v1054 = vsel %vm1053, 1, 0
        %v1055 = vcvt.s32.f32 %v1054
        %vm1056 = vmxor %vm1024, 1
        %vm1057 = vmand %vm1023, %vm1056
        %v1058 = vsel %vm1057, 1, 0
        %v1059 = vcvt.s32.f32 %v1058
        %vm1060 = vmxor %vm1025, 1
        %vm1061 = vmand %vm1024, %vm1060
        %v1062 = vsel %vm1061, 1, 0
        %v1063 = vcvt.s32.f32 %v1062
        %vm1064 = vmxor %vm1026, 1
        %vm1065 = vmand %vm1025, %vm1064
        %v1066 = vsel %vm1065, 1, 0
        %v1067 = vcvt.s32.f32 %v1066
        %vm1068 = vmxor %vm1027, 1
        %vm1069 = vmand %vm1026, %vm1068
        %v1070 = vsel %vm1069, 1, 0
        %v1071 = vcvt.s32.f32 %v1070
        %v1072 = vmul.f32 %v1015, %v456
        %v1073 = vadd.f32 %v1072, %v462
        %v1074 = vmul.f32 %v1015, %v467
        %v1075 = vadd.f32 %v1074, %v472
        %v1076 = vmul.f32 %v1015, %v477
        %v1077 = vadd.f32 %v1076, %v482
        %v1078 = vmul.f32 %v1015, %v487
        %v1079 = vadd.f32 %v1078, %v492
        %v1080 = vmul.f32 %v1015, %v497
        %v1081 = vadd.f32 %v1080, %v502
        %v1082 = vmul.f32 %v1015, %v507
        %v1083 = vadd.f32 %v1082, %v512
        %v1084 = vmul.f32 %v1015, %v517
        %v1085 = vadd.f32 %v1084, %v522
        %v1086 = vmul.f32 %v1015, %v527
        %v1087 = vadd.f32 %v1086, %v532
        %v1088 = vmul.f32 %v1015, %v537
        %v1089 = vadd.f32 %v1088, %v542
        %v1090 = vmul.f32 %v1015, %v547
        %v1091 = vadd.f32 %v1090, %v552
        %v1092 = vmul.f32 %v1015, %v557
        %v1093 = vadd.f32 %v1092, %v562
        %v1094 = vmul.f32 %v1073, %v1031
        %v1095 = vsub.f32 1.0, %v1075
        %v1096 = vmul.f32 %v1095, %v1035
        %v1097 = vadd.f32 %v1094, %v1096
        %v1098 = vmul.f32 %v1075, %v1035
        %v1099 = vsub.f32 1.0, %v1077
        %v1100 = vmul.f32 %v1099, %v1039
        %v1101 = vadd.f32 %v1098, %v1100
        %v1102 = vmul.f32 %v1077, %v1039
        %v1103 = vsub.f32 1.0, %v1079
        %v1104 = vmul.f32 %v1103, %v1043
        %v1105 = vadd.f32 %v1102, %v1104
        %v1106 = vmul.f32 %v1079, %v1043
        %v1107 = vsub.f32 1.0, %v1081
        %v1108 = vmul.f32 %v1107, %v1047
        %v1109 = vadd.f32 %v1106, %v1108
        %v1110 = vmul.f32 %v1081, %v1047
        %v1111 = vsub.f32 1.0, %v1083
        %v1112 = vmul.f32 %v1111, %v1051
        %v1113 = vadd.f32 %v1110, %v1112
        %v1114 = vmul.f32 %v1083, %v1051
        %v1115 = vsub.f32 1.0, %v1085
        %v1116 = vmul.f32 %v1115, %v1055
        %v1117 = vadd.f32 %v1114, %v1116
        %v1118 = vmul.f32 %v1085, %v1055
        %v1119 = vsub.f32 1.0, %v1087
        %v1120 = vmul.f32 %v1119, %v1059
        %v1121 = vadd.f32 %v1118, %v1120
        %v1122 = vmul.f32 %v1087, %v1059
        %v1123 = vsub.f32 1.0, %v1089
        %v1124 = vmul.f32 %v1123, %v1063
        %v1125 = vadd.f32 %v1122, %v1124
        %v1126 = vmul.f32 %v1089, %v1063
        %v1127 = vsub.f32 1.0, %v1091
        %v1128 = vmul.f32 %v1127, %v1067
        %v1129 = vadd.f32 %v1126, %v1128
        %v1130 = vmul.f32 %v1091, %v1067
        %v1131 = vsub.f32 1.0, %v1093
        %v1132 = vmul.f32 %v1131, %v1071
        %v1133 = vadd.f32 %v1130, %v1132
        %v1134 = vmul.f32 %v1015, %v607
        %v1135 = vadd.f32 %v1134, %v612
        %v1136 = vmul.f32 %v1015, %v617
        %v1137 = vadd.f32 %v1136, %v622
        %v1138 = vmul.f32 %v1015, %v627
        %v1139 = vadd.f32 %v1138, %v632
        %v1140 = vmul.f32 %v1015, %v637
        %v1141 = vadd.f32 %v1140, %v642
        %v1142 = vmul.f32 %v1015, %v647
        %v1143 = vadd.f32 %v1142, %v652
        %v1144 = vmul.f32 %v1015, %v657
        %v1145 = vadd.f32 %v1144, %v662
        %v1146 = vmul.f32 %v1015, %v667
        %v1147 = vadd.f32 %v1146, %v672
        %v1148 = vmul.f32 %v1015, %v677
        %v1149 = vadd.f32 %v1148, %v682
        %v1150 = vmul.f32 %v1015, %v687
        %v1151 = vadd.f32 %v1150, %v692
        %v1152 = vmul.f32 %v1015, %v697
        %v1153 = vadd.f32 %v1152, %v702
        %v1154 = vmul.f32 %v1135, %v1097
        %v1155 = vsub.f32 1.0, %v1137
        %v1156 = vmul.f32 %v1155, %v1101
        %v1157 = vadd.f32 %v1154, %v1156
        %v1158 = vmul.f32 %v1137, %v1101
        %v1159 = vsub.f32 1.0, %v1139
        %v1160 = vmul.f32 %v1159, %v1105
        %v1161 = vadd.f32 %v1158, %v1160
        %v1162 = vmul.f32 %v1139, %v1105
        %v1163 = vsub.f32 1.0, %v1141
        %v1164 = vmul.f32 %v1163, %v1109
        %v1165 = vadd.f32 %v1162, %v1164
        %v1166 = vmul.f32 %v1141, %v1109
        %v1167 = vsub.f32 1.0, %v1143
        %v1168 = vmul.f32 %v1167, %v1113
        %v1169 = vadd.f32 %v1166, %v1168
        %v1170 = vmul.f32 %v1143, %v1113
        %v1171 = vsub.f32 1.0, %v1145
        %v1172 = vmul.f32 %v1171, %v1117
        %v1173 = vadd.f32 %v1170, %v1172
        %v1174 = vmul.f32 %v1145, %v1117
        %v1175 = vsub.f32 1.0, %v1147
        %v1176 = vmul.f32 %v1175, %v1121
        %v1177 = vadd.f32 %v1174, %v1176
        %v1178 = vmul.f32 %v1147, %v1121
        %v1179 = vsub.f32 1.0, %v1149
        %v1180 = vmul.f32 %v1179, %v1125
        %v1181 = vadd.f32 %v1178, %v1180
        %v1182 = vmul.f32 %v1149, %v1125
        %v1183 = vsub.f32 1.0, %v1151
        %v1184 = vmul.f32 %v1183, %v1129
        %v1185 = vadd.f32 %v1182, %v1184
        %v1186 = vmul.f32 %v1151, %v1129
        %v1187 = vsub.f32 1.0, %v1153
        %v1188 = vmul.f32 %v1187, %v1133
        %v1189 = vadd.f32 %v1186, %v1188
        %v1190 = vmul.f32 %v1015, %v743
        %v1191 = vadd.f32 %v1190, %v748
        %v1192 = vmul.f32 %v1015, %v753
        %v1193 = vadd.f32 %v1192, %v758
        %v1194 = vmul.f32 %v1015, %v763
        %v1195 = vadd.f32 %v1194, %v768
        %v1196 = vmul.f32 %v1015, %v773
        %v1197 = vadd.f32 %v1196, %v778
        %v1198 = vmul.f32 %v1015, %v783
        %v1199 = vadd.f32 %v1198, %v788
        %v1200 = vmul.f32 %v1015, %v793
        %v1201 = vadd.f32 %v1200, %v798
        %v1202 = vmul.f32 %v1015, %v803
        %v1203 = vadd.f32 %v1202, %v808
        %v1204 = vmul.f32 %v1015, %v813
        %v1205 = vadd.f32 %v1204, %v818
        %v1206 = vmul.f32 %v1015, %v823
        %v1207 = vadd.f32 %v1206, %v828
        %v1208 = vmul.f32 %v1191, %v1157
        %v1209 = vsub.f32 1.0, %v1193
        %v1210 = vmul.f32 %v1209, %v1161
        %v1211 = vadd.f32 %v1208, %v1210
        %v1212 = vmul.f32 %v1193, %v1161
        %v1213 = vsub.f32 1.0, %v1195
        %v1214 = vmul.f32 %v1213, %v1165
        %v1215 = vadd.f32 %v1212, %v1214
        %v1216 = vmul.f32 %v1195, %v1165
        %v1217 = vsub.f32 1.0, %v1197
        %v1218 = vmul.f32 %v1217, %v1169
        %v1219 = vadd.f32 %v1216, %v1218
        %v1220 = vmul.f32 %v1197, %v1169
        %v1221 = vsub.f32 1.0, %v1199
        %v1222 = vmul.f32 %v1221, %v1173
        %v1223 = vadd.f32 %v1220, %v1222
        %v1224 = vmul.f32 %v1199, %v1173
        %v1225 = vsub.f32 1.0, %v1201
        %v1226 = vmul.f32 %v1225, %v1177
        %v1227 = vadd.f32 %v1224, %v1226
        %v1228 = vmul.f32 %v1201, %v1177
        %v1229 = vsub.f32 1.0, %v1203
        %v1230 = vmul.f32 %v1229, %v1181
        %v1231 = vadd.f32 %v1228, %v1230
        %v1232 = vmul.f32 %v1203, %v1181
        %v1233 = vsub.f32 1.0, %v1205
        %v1234 = vmul.f32 %v1233, %v1185
        %v1235 = vadd.f32 %v1232, %v1234
        %v1236 = vmul.f32 %v1205, %v1185
        %v1237 = vsub.f32 1.0, %v1207
        %v1238 = vmul.f32 %v1237, %v1189
        %v1239 = vadd.f32 %v1236, %v1238
        %v1240 = vxor.u32 %v1015, 2147483648
        %v1241 = vmul.f32 %v1240, 1.442695
        %v1242 = vpow.pop %v1241
        %v1243 = vadd.f32 %v1242, 1.0
        %v1244 = vrcp.pop %v1243
        %v1245 = vmul.f32 1.0, %v1244
        %v1246 = vmul.f32 %v1015, %v1245
        %v1247 = vmul.f32 %v873, %v1211
        %v1248 = vmul.f32 %v878, %v1215
        %v1249 = vadd.f32 %v1247, %v1248
        %v1250 = vmul.f32 %v884, %v1219
        %v1251 = vadd.f32 %v1249, %v1250
        %v1252 = vmul.f32 %v890, %v1223
        %v1253 = vadd.f32 %v1251, %v1252
        %v1254 = vmul.f32 %v896, %v1227
        %v1255 = vadd.f32 %v1253, %v1254
        %v1256 = vmul.f32 %v902, %v1231
        %v1257 = vadd.f32 %v1255, %v1256
        %v1258 = vmul.f32 %v908, %v1235
        %v1259 = vadd.f32 %v1257, %v1258
        %v1260 = vmul.f32 %v914, %v1239
        %v1261 = vadd.f32 %v1259, %v1260
        %v1262 = vmul.f32 %v921, %v1246
        %v1263 = vmul.f32 %v926, %v1261
        %v1264 = vadd.f32 %v1262, %v1263
        %s1265 = scalar_lea.vmem %s316, 4 [#allocation5]
        %1266 = vst [vmem:[%s1265] sm:$0xf] %v1261
        %s1267 = scalar_lea.vmem %s323, 4 [#allocation6]
        %1268 = vst [vmem:[%s1267] sm:$0xf] %v1264
        %v1269 = vrot.slane %v1264, 4
        %v1270 = vadd.f32 %v1264, %v1269
        %v1271 = vrot.slane %v1270, 2
        %v1272 = vadd.f32 %v1270, %v1271
        %v1273 = vrot.slane %v1272, 1
        %v1274 = vadd.f32 %v1272, %v1273
        %v1275 = vmul.f32 %v941, %v1211
        %v1276 = vmul.f32 %v946, %v1215
        %v1277 = vadd.f32 %v1275, %v1276
        %v1278 = vmul.f32 %v952, %v1219
        %v1279 = vadd.f32 %v1277, %v1278
        %v1280 = vmul.f32 %v958, %v1223
        %v1281 = vadd.f32 %v1279, %v1280
        %v1282 = vmul.f32 %v964, %v1227
        %v1283 = vadd.f32 %v1281, %v1282
        %v1284 = vmul.f32 %v970, %v1231
        %v1285 = vadd.f32 %v1283, %v1284
        %v1286 = vmul.f32 %v976, %v1235
        %v1287 = vadd.f32 %v1285, %v1286
        %v1288 = vmul.f32 %v982, %v1239
        %v1289 = vadd.f32 %v1287, %v1288
        %v1290 = vmul.f32 %v989, %v1246
        %v1291 = vmul.f32 %v994, %v1289
        %v1292 = vadd.f32 %v1290, %v1291
        %s1293 = sadd.s32 1, 2
        %s1294 = smul.addr %s1293, 4
        %s1295 = scalar_lea.vmem %s316, %s1294 [#allocation5]
        %1296 = vst [vmem:[%s1295] sm:$0xf] %v1289
        %s1297 = smul.addr %s1293, 4
        %s1298 = scalar_lea.vmem %s323, %s1297 [#allocation6]
        %1299 = vst [vmem:[%s1298] sm:$0xf] %v1292
        %v1300 = vrot.slane %v1292, 4
        %v1301 = vadd.f32 %v1292, %v1300
        %v1302 = vrot.slane %v1301, 2
        %v1303 = vadd.f32 %v1301, %v1302
        %v1304 = vrot.slane %v1303, 1
        %v1305 = vadd.f32 %v1303, %v1304
        %v1306 = vsel %vm1011, %v1274, %v1305
        %s1307 = scalar_lea.vmem %s330, 2 [#allocation8]
        %1308 = vst [vmem:[%s1307] sm:$0x3] %v1306
        %s1309 = sand.u32 %s166, 1
        %s1310 = scalar_lea.sflag [#allocation4], %s1309
        %s1311 = sand.u32 %s166, 1
        %s1312 = smul.addr %s1311, 16
        %s1313 = scalar_lea.vmem [#allocation5], %s1312
        %s1314 = sand.u32 %s27, 1
        %s1315 = scalar_lea.sflag [#allocation7], %s1314
        %s1316 = sand.u32 %s192, 1
        %s1317 = smul.addr %s1316, 16
        %s1318 = scalar_lea.vmem [#allocation6], %s1317
        %s1319 = sand.u32 %s27, 1
        %s1320 = scalar_lea.sflag [#allocation7], %s1319
        %s1321 = sand.u32 %s218, 1
        %s1322 = smul.addr %s1321, 4
        %s1323 = scalar_lea.vmem [#allocation8], %s1322
        // Predicated region
        $region49: #{tpu_custom_call.1} parent=43 // pred_check
          %p1324 = pneg %p176
        $region50: #{tpu_custom_call.1} parent=43 // pred_check_branch
          %1326 = sbr.rel (%p1324) target = $region52
        $region51: #{tpu_custom_call.1} parent=43 // pred_region
          %s1327 = smul.u32 2, %s27
          %s1329 = ssub.s32 256, 256
          %1330 = vsyncadd %s1310, %s1329
          %s1331 = smul.addr %s1327, 64
          %s1332 = scalar_lea.hbm %s6, %s1331
          %s1333 = sshll.u32 %s1313, 4
          %s1334 = int_to_ptr.vmem [resolvable:$true] %s1333
          %1339 = dma.vmem_to_hbm [thread:$0]  %s1334, 256, %s1332, %s1310, 128, 256, 8
        $region52: #{tpu_custom_call.1} parent=43 // pred_fallthru
          _
        // Predicated region
        $region53: #{tpu_custom_call.1} parent=43 // pred_check
          %p1340 = pneg %p202
        $region54: #{tpu_custom_call.1} parent=43 // pred_check_branch
          %1342 = sbr.rel (%p1340) target = $region56
        $region55: #{tpu_custom_call.1} parent=43 // pred_region
          %s1343 = smul.u32 2, %s27
          %s1345 = ssub.s32 256, 256
          %1346 = vsyncadd %s1315, %s1345
          %s1347 = smul.addr %s1343, 64
          %s1348 = scalar_lea.hbm %s7, %s1347
          %s1349 = sshll.u32 %s1318, 4
          %s1350 = int_to_ptr.vmem [resolvable:$true] %s1349
          %1355 = dma.vmem_to_hbm [thread:$0]  %s1350, 256, %s1348, %s1315, 128, 256, 8
        $region56: #{tpu_custom_call.1} parent=43 // pred_fallthru
          _
        // Predicated region
        $region57: #{tpu_custom_call.1} parent=43 // pred_check
          %p1356 = pneg %p228
        $region58: #{tpu_custom_call.1} parent=43 // pred_check_branch
          %1358 = sbr.rel (%p1356) target = $region60
        $region59: #{tpu_custom_call.1} parent=43 // pred_region
          %s1359 = smul.u32 2, %s27
          %s1361 = ssub.s32 64, 64
          %1362 = vsyncadd %s1320, %s1361
          %s1363 = smul.addr %s1359, 32
          %s1364 = scalar_lea.hbm %s8, %s1363
          %s1366 = sshll.u32 %s1323, 4
          %s1367 = int_to_ptr.vmem [resolvable:$true] %s1366
          %1369 = dma.vmem_to_hbm [thread:$0]  %s1367, 64, %s1364, %s1320
        $region60: #{tpu_custom_call.1} parent=43 // pred_fallthru
          _
      $region44: #{tpu_custom_call.1} parent=5 // pred_fallthru
        _
      %p1370 = scmp.le.s32.totalorder 2, %s22
      // Predicated region
      $region61: #{tpu_custom_call.1} parent=5 // pred_check
        %p1371 = pneg %p1370
      $region62: #{tpu_custom_call.1} parent=5 // pred_check_branch
        %1373 = sbr.rel (%p1371) target = $region64
      $region63: #{tpu_custom_call.1} parent=5 // pred_region
        %s1374 = ssub.s32 %s22, 2
        // Predicated region
        $region65: #{tpu_custom_call.1} parent=63 // pred_check
          %p1375 = pneg %p182
        $region66: #{tpu_custom_call.1} parent=63 // pred_check_branch
          %1377 = sbr.rel (%p1375) target = $region68
        $region67: #{tpu_custom_call.1} parent=63 // pred_region
          %s1378 = sand.u32 %s167, 1
          %s1379 = scalar_lea.sflag [#allocation4], %s1378
          %s1380 = sand.u32 %s167, 1
          %s1381 = smul.addr %s1380, 16
          %s1382 = scalar_lea.vmem [#allocation5], %s1381
          %1383 = dma.done %s1379, 256
        $region68: #{tpu_custom_call.1} parent=63 // pred_fallthru
          _
        // Predicated region
        $region69: #{tpu_custom_call.1} parent=63 // pred_check
          %p1384 = pneg %p208
        $region70: #{tpu_custom_call.1} parent=63 // pred_check_branch
          %1386 = sbr.rel (%p1384) target = $region72
        $region71: #{tpu_custom_call.1} parent=63 // pred_region
          %s1387 = sand.u32 %s28, 1
          %s1388 = scalar_lea.sflag [#allocation7], %s1387
          %s1389 = sand.u32 %s193, 1
          %s1390 = smul.addr %s1389, 16
          %s1391 = scalar_lea.vmem [#allocation6], %s1390
          %1392 = dma.done %s1388, 256
        $region72: #{tpu_custom_call.1} parent=63 // pred_fallthru
          _
        // Predicated region
        $region73: #{tpu_custom_call.1} parent=63 // pred_check
          %p1393 = pneg %p234
        $region74: #{tpu_custom_call.1} parent=63 // pred_check_branch
          %1395 = sbr.rel (%p1393) target = $region76
        $region75: #{tpu_custom_call.1} parent=63 // pred_region
          %s1396 = sand.u32 %s28, 1
          %s1397 = scalar_lea.sflag [#allocation7], %s1396
          %s1398 = sand.u32 %s219, 1
          %s1399 = smul.addr %s1398, 4
          %s1400 = scalar_lea.vmem [#allocation8], %s1399
          %1401 = dma.done %s1397, 64
        $region76: #{tpu_custom_call.1} parent=63 // pred_fallthru
          _
      $region64: #{tpu_custom_call.1} parent=5 // pred_fallthru
        _
    $region6: #{tpu_custom_call.1} parent=1 // loop_footer
      %s26 = sadd.s32 1, %s22
    $region7: #{tpu_custom_call.1} parent=1 // loop_footer_branch
      %21 = sbr.rel target = $region3
    $region8: #{tpu_custom_call.1} parent=1 // loop_exit
      _
    %1402 = vsyncpa [#allocation3], 1
    %s1403 = scalar_lea.sflag [#allocation3], 1
    %1404 = vsyncpa %s1403, 1
    %1405 = vsyncpa [#allocation4], 1
    %s1406 = scalar_lea.sflag [#allocation4], 1
    %1407 = vsyncpa %s1406, 1
    %1408 = vsyncpa [#allocation7], 1
    %s1409 = scalar_lea.sflag [#allocation7], 1
    %1410 = vsyncpa %s1409, 1

</llo_original>
